<compile_context>
chip_gen: v7x
topology: tpu7x:2x2x1
jax: 0.10.0
libtpu: 0.0.40
codegen_flags: <defaults>
</compile_context>

<pallas_src>
import functools

import jax
import jax.numpy as jnp
from jax.experimental import pallas as pl
from jax.experimental.pallas import tpu as pltpu

_K = 3                               # kernel_size == stride (PyTorch default), padding = 0
_BAND_IN = 48                        # input rows per band: multiple of 3 and of 16 (bf16 tiling)
_TARGET_BLOCK_BYTES = 12 * 1024 * 1024
_VMEM_LIMIT_BYTES = 48 * 1024 * 1024


def _maxpool_kernel(x_ref, t_ref, o_ref, *, H, block_h, th_out, mask_rows, min_val):
    # x_ref: (tb, block_h, W) input band   o_ref: (tb, th_out, Wo) pooled band
    # t_ref: (3, W, Wo) 0/1 column-selection matrices (ceil_mode clamp built in)
    if mask_rows:
        row0 = pl.program_id(1) * block_h        # first global input row of this band

    for j in range(th_out):
        h0 = _K * j
        h1 = min(h0 + _K, block_h)               # ceil_mode clip inside a full-H band
        win = x_ref[:, h0:h1, :]                 # (tb, <=3, W) dense load
        if mask_rows:
            # Ragged last band: rows >= H hold undefined data; force them to
            # dtype-min so they can never win a max (finite, so no 0*inf NaNs
            # in the selection matmul either).
            rid = row0 + h0 + jax.lax.broadcasted_iota(jnp.int32, win.shape, 1)
            win = jnp.where(rid < H, win, jnp.asarray(min_val, win.dtype))
        rmax = jnp.max(win, axis=1)              # (tb, W) row-pooled slab

        # Column pooling + stride-3 downsample fused into 3 selection matmuls.
        acc = jnp.dot(rmax, t_ref[0], preferred_element_type=jnp.float32)
        acc = jnp.maximum(acc, jnp.dot(rmax, t_ref[1], preferred_element_type=jnp.float32))
        acc = jnp.maximum(acc, jnp.dot(rmax, t_ref[2], preferred_element_type=jnp.float32))
        o_ref[:, j, :] = acc.astype(o_ref.dtype)  # one dense (tb, Wo) row-slab store


def _col_select_matrices(W, Wo, dtype):
    """T_k[w, c] = 1 iff w == min(3c + k, W - 1)  (clamp == ceil_mode clipping)."""
    w_idx = jnp.arange(W, dtype=jnp.int32)[:, None]       # (W, 1)
    c_idx = jnp.arange(Wo, dtype=jnp.int32)[None, :]       # (1, Wo)
    mats = []
    for k in range(_K):
        src = jnp.minimum(_K * c_idx + k, W - 1)
        mats.append((w_idx == src).astype(dtype))           # (W, Wo)
    return jnp.stack(mats, axis=0)                           # (3, W, Wo)


def _pick_tb(B, band_plane_bytes, n_bands):
    """Largest plane-chunk that fits the VMEM budget, preferring >= 4 grid steps."""
    tb = max(1, min(B, _TARGET_BLOCK_BYTES // max(1, band_plane_bytes)))
    while tb > 1 and pl.cdiv(B, tb) * n_bands < 4:
        tb = (tb + 1) // 2
    return tb


def maxpool2d_k3_ceil(x):
    """MaxPool2d(kernel_size=3, stride=3, padding=0, ceil_mode=True) on NCHW input."""
    if not jnp.issubdtype(x.dtype, jnp.floating):
        # TODO(synk): integer dtypes would need a non-MXU column-extraction path.
        raise NotImplementedError("maxpool2d_k3_ceil supports floating-point inputs only")

    N, C, H, W = x.shape
    Ho = pl.cdiv(H, _K)
    Wo = pl.cdiv(W, _K)
    B = N * C
    xb = x.reshape(B, H, W)                                  # free reshape

    if H > _BAND_IN:
        block_h, th_out = _BAND_IN, _BAND_IN // _K           # 48 in rows -> 16 out rows
    else:
        block_h, th_out = H, Ho                              # single band, full H
    n_bands = pl.cdiv(Ho, th_out)

    itemsize = x.dtype.itemsize
    tb = _pick_tb(B, block_h * W * itemsize, n_bands)
    grid = (pl.cdiv(B, tb), n_bands)

    tsel = _col_select_matrices(W, Wo, x.dtype)
    min_val = float(jnp.finfo(x.dtype).min)

    kernel = functools.partial(
        _maxpool_kernel,
        H=H, block_h=block_h, th_out=th_out,
        mask_rows=(H % block_h != 0), min_val=min_val)

    flops = 2 * B * H * W + 2 * _K * B * Ho * W * Wo          # maxes + selection matmuls
    bytes_accessed = (B * H * W + B * Ho * Wo) * itemsize

    out = pl.pallas_call(
        kernel,
        out_shape=jax.ShapeDtypeStruct((B, Ho, Wo), x.dtype),
        grid=grid,
        in_specs=[
            pl.BlockSpec((tb, block_h, W), lambda b, h: (b, h, 0)),
            pl.BlockSpec((_K, W, Wo), lambda b, h: (0, 0, 0)),   # constant -> fetched once
        ],
        out_specs=pl.BlockSpec((tb, th_out, Wo), lambda b, h: (b, h, 0)),
        compiler_params=pltpu.CompilerParams(
            dimension_semantics=("parallel", "parallel"),
            vmem_limit_bytes=_VMEM_LIMIT_BYTES),
        cost_estimate=pl.CostEstimate(
            flops=int(flops), transcendentals=0, bytes_accessed=int(bytes_accessed)),
    )(xb, tsel)

    return out.reshape(N, C, Ho, Wo)


def _reference_maxpool(x):
    """Pure-JAX reference of MaxPool2d(k=3, ceil_mode=True) for verification."""
    N, C, H, W = x.shape
    Ho = -(-H // _K)
    Wo = -(-W // _K)
    Hp, Wp = Ho * _K, Wo * _K
    lowest = jnp.finfo(x.dtype).min
    xpad = jnp.full((N, C, Hp, Wp), lowest, dtype=x.dtype)
    xpad = xpad.at[:, :, :H, :W].set(x)
    return xpad.reshape(N, C, Ho, _K, Wo, _K).max(axis=(3, 5))


if __name__ == "__main__":
    key = jax.random.PRNGKey(0)
    x = jax.random.normal(key, (2, 4, 16, 16), dtype=jnp.float32)
    # Quantize the test data to bf16-representable values so the exact-equality
    # check below is independent of how the MXU handles f32 operands; the
    # pooling / indexing logic is still verified element-for-element.
    x = x.astype(jnp.bfloat16).astype(jnp.float32)

    y = maxpool2d_k3_ceil(x)
    jax.block_until_ready(y)

    y_ref = _reference_maxpool(x)
    assert y.shape == (2, 4, 6, 6), y.shape
    assert y.dtype == x.dtype, y.dtype
    assert bool(jnp.array_equal(y, y_ref)), "Pallas maxpool mismatch vs reference"

    print("KERNEL_OK")
</pallas_src>

<mosaic_0001>
module attributes {stable_mosaic.version = 11 : i64} {
  func.func @_maxpool_kernel(%arg0: i32, %arg1: i32, %arg2: memref<2x16x16xf32, #tpu.memory_space<vmem>>, %arg3: memref<3x16x6xf32, #tpu.memory_space<vmem>>, %arg4: memref<2x6x6xf32, #tpu.memory_space<vmem>>) attributes {dimension_semantics = [#tpu.dimension_semantics<parallel>, #tpu.dimension_semantics<parallel>], iteration_bounds = array<i64: 4, 1>, scalar_prefetch = 0 : i64, scratch_operands = 0 : i64, tpu.core_type = #tpu.core_type<tc>, window_params = [{transform_indices = @transform_0, window_bounds = array<i64: 2, 16, 16>}, {pipeline_mode = #tpu.pipeline_mode<synchronous>, transform_indices = @transform_1, window_bounds = array<i64: 3, 16, 6>}, {transform_indices = @transform_2, window_bounds = array<i64: 2, 6, 6>}]} {
    %c0 = arith.constant 0 : index
    %c0_0 = arith.constant 0 : index
    %c0_1 = arith.constant 0 : index
    %0 = vector.load %arg2[%c0, %c0_0, %c0_1] : memref<2x16x16xf32, #tpu.memory_space<vmem>>, vector<2x3x16xf32>
    %cst = arith.constant dense<0xFF800000> : vector<2x16xf32>
    %1 = vector.multi_reduction <maximumf>, %0, %cst [1] : vector<2x3x16xf32> to vector<2x16xf32>
    %c0_2 = arith.constant 0 : index
    %c0_3 = arith.constant 0 : index
    %c0_4 = arith.constant 0 : index
    %2 = vector.load %arg3[%c0_2, %c0_3, %c0_4] : memref<3x16x6xf32, #tpu.memory_space<vmem>>, vector<1x16x6xf32>
    %3 = vector.shape_cast %2 : vector<1x16x6xf32> to vector<16x6xf32>
    %cst_5 = arith.constant dense<0.000000e+00> : vector<2x6xf32>
    %4 = tpu.matmul %1, %3, %cst_5 {dimension_numbers = #tpu.dot_dimension_numbers<[1], [0], [0], [1], [0, 0, 1, 1], [], []>} : vector<2x16xf32>, vector<16x6xf32>, vector<2x6xf32> -> vector<2x6xf32>
    %c1 = arith.constant 1 : index
    %c0_6 = arith.constant 0 : index
    %c0_7 = arith.constant 0 : index
    %5 = vector.load %arg3[%c1, %c0_6, %c0_7] : memref<3x16x6xf32, #tpu.memory_space<vmem>>, vector<1x16x6xf32>
    %6 = vector.shape_cast %5 : vector<1x16x6xf32> to vector<16x6xf32>
    %cst_8 = arith.constant dense<0.000000e+00> : vector<2x6xf32>
    %7 = tpu.matmul %1, %6, %cst_8 {dimension_numbers = #tpu.dot_dimension_numbers<[1], [0], [0], [1], [0, 0, 1, 1], [], []>} : vector<2x16xf32>, vector<16x6xf32>, vector<2x6xf32> -> vector<2x6xf32>
    %8 = arith.maximumf %4, %7 : vector<2x6xf32>
    %c2 = arith.constant 2 : index
    %c0_9 = arith.constant 0 : index
    %c0_10 = arith.constant 0 : index
    %9 = vector.load %arg3[%c2, %c0_9, %c0_10] : memref<3x16x6xf32, #tpu.memory_space<vmem>>, vector<1x16x6xf32>
    %10 = vector.shape_cast %9 : vector<1x16x6xf32> to vector<16x6xf32>
    %cst_11 = arith.constant dense<0.000000e+00> : vector<2x6xf32>
    %11 = tpu.matmul %1, %10, %cst_11 {dimension_numbers = #tpu.dot_dimension_numbers<[1], [0], [0], [1], [0, 0, 1, 1], [], []>} : vector<2x16xf32>, vector<16x6xf32>, vector<2x6xf32> -> vector<2x6xf32>
    %12 = arith.maximumf %8, %11 : vector<2x6xf32>
    %c0_12 = arith.constant 0 : index
    %c0_13 = arith.constant 0 : index
    %c0_14 = arith.constant 0 : index
    %13 = vector.load %arg4[%c0_12, %c0_13, %c0_14] : memref<2x6x6xf32, #tpu.memory_space<vmem>>, vector<2x1x6xf32>
    %14 = vector.shape_cast %13 : vector<2x1x6xf32> to vector<2x6xf32>
    %15 = vector.shape_cast %12 : vector<2x6xf32> to vector<2x1x6xf32>
    tpu.vector_store %arg4[%c0_12, %c0_13, %c0_14], %15 {strides = array<i32>} : memref<2x6x6xf32, #tpu.memory_space<vmem>>, vector<2x1x6xf32>,
    %c0_15 = arith.constant 0 : index
    %c3 = arith.constant 3 : index
    %c0_16 = arith.constant 0 : index
    %16 = vector.load %arg2[%c0_15, %c3, %c0_16] : memref<2x16x16xf32, #tpu.memory_space<vmem>>, vector<2x3x16xf32>
    %cst_17 = arith.constant dense<0xFF800000> : vector<2x16xf32>
    %17 = vector.multi_reduction <maximumf>, %16, %cst_17 [1] : vector<2x3x16xf32> to vector<2x16xf32>
    %c0_18 = arith.constant 0 : index
    %c0_19 = arith.constant 0 : index
    %c0_20 = arith.constant 0 : index
    %18 = vector.load %arg3[%c0_18, %c0_19, %c0_20] : memref<3x16x6xf32, #tpu.memory_space<vmem>>, vector<1x16x6xf32>
    %19 = vector.shape_cast %18 : vector<1x16x6xf32> to vector<16x6xf32>
    %cst_21 = arith.constant dense<0.000000e+00> : vector<2x6xf32>
    %20 = tpu.matmul %17, %19, %cst_21 {dimension_numbers = #tpu.dot_dimension_numbers<[1], [0], [0], [1], [0, 0, 1, 1], [], []>} : vector<2x16xf32>, vector<16x6xf32>, vector<2x6xf32> -> vector<2x6xf32>
    %c1_22 = arith.constant 1 : index
    %c0_23 = arith.constant 0 : index
    %c0_24 = arith.constant 0 : index
    %21 = vector.load %arg3[%c1_22, %c0_23, %c0_24] : memref<3x16x6xf32, #tpu.memory_space<vmem>>, vector<1x16x6xf32>
    %22 = vector.shape_cast %21 : vector<1x16x6xf32> to vector<16x6xf32>
    %cst_25 = arith.constant dense<0.000000e+00> : vector<2x6xf32>
    %23 = tpu.matmul %17, %22, %cst_25 {dimension_numbers = #tpu.dot_dimension_numbers<[1], [0], [0], [1], [0, 0, 1, 1], [], []>} : vector<2x16xf32>, vector<16x6xf32>, vector<2x6xf32> -> vector<2x6xf32>
    %24 = arith.maximumf %20, %23 : vector<2x6xf32>
    %c2_26 = arith.constant 2 : index
    %c0_27 = arith.constant 0 : index
    %c0_28 = arith.constant 0 : index
    %25 = vector.load %arg3[%c2_26, %c0_27, %c0_28] : memref<3x16x6xf32, #tpu.memory_space<vmem>>, vector<1x16x6xf32>
    %26 = vector.shape_cast %25 : vector<1x16x6xf32> to vector<16x6xf32>
    %cst_29 = arith.constant dense<0.000000e+00> : vector<2x6xf32>
    %27 = tpu.matmul %17, %26, %cst_29 {dimension_numbers = #tpu.dot_dimension_numbers<[1], [0], [0], [1], [0, 0, 1, 1], [], []>} : vector<2x16xf32>, vector<16x6xf32>, vector<2x6xf32> -> vector<2x6xf32>
    %28 = arith.maximumf %24, %27 : vector<2x6xf32>
    %c0_30 = arith.constant 0 : index
    %c1_31 = arith.constant 1 : index
    %c0_32 = arith.constant 0 : index
    %29 = vector.load %arg4[%c0_30, %c1_31, %c0_32] : memref<2x6x6xf32, #tpu.memory_space<vmem>>, vector<2x1x6xf32>
    %30 = vector.shape_cast %29 : vector<2x1x6xf32> to vector<2x6xf32>
    %31 = vector.shape_cast %28 : vector<2x6xf32> to vector<2x1x6xf32>
    tpu.vector_store %arg4[%c0_30, %c1_31, %c0_32], %31 {strides = array<i32>} : memref<2x6x6xf32, #tpu.memory_space<vmem>>, vector<2x1x6xf32>,
    %c0_33 = arith.constant 0 : index
    %c6 = arith.constant 6 : index
    %c0_34 = arith.constant 0 : index
    %32 = vector.load %arg2[%c0_33, %c6, %c0_34] : memref<2x16x16xf32, #tpu.memory_space<vmem>>, vector<2x3x16xf32>
    %cst_35 = arith.constant dense<0xFF800000> : vector<2x16xf32>
    %33 = vector.multi_reduction <maximumf>, %32, %cst_35 [1] : vector<2x3x16xf32> to vector<2x16xf32>
    %c0_36 = arith.constant 0 : index
    %c0_37 = arith.constant 0 : index
    %c0_38 = arith.constant 0 : index
    %34 = vector.load %arg3[%c0_36, %c0_37, %c0_38] : memref<3x16x6xf32, #tpu.memory_space<vmem>>, vector<1x16x6xf32>
    %35 = vector.shape_cast %34 : vector<1x16x6xf32> to vector<16x6xf32>
    %cst_39 = arith.constant dense<0.000000e+00> : vector<2x6xf32>
    %36 = tpu.matmul %33, %35, %cst_39 {dimension_numbers = #tpu.dot_dimension_numbers<[1], [0], [0], [1], [0, 0, 1, 1], [], []>} : vector<2x16xf32>, vector<16x6xf32>, vector<2x6xf32> -> vector<2x6xf32>
    %c1_40 = arith.constant 1 : index
    %c0_41 = arith.constant 0 : index
    %c0_42 = arith.constant 0 : index
    %37 = vector.load %arg3[%c1_40, %c0_41, %c0_42] : memref<3x16x6xf32, #tpu.memory_space<vmem>>, vector<1x16x6xf32>
    %38 = vector.shape_cast %37 : vector<1x16x6xf32> to vector<16x6xf32>
    %cst_43 = arith.constant dense<0.000000e+00> : vector<2x6xf32>
    %39 = tpu.matmul %33, %38, %cst_43 {dimension_numbers = #tpu.dot_dimension_numbers<[1], [0], [0], [1], [0, 0, 1, 1], [], []>} : vector<2x16xf32>, vector<16x6xf32>, vector<2x6xf32> -> vector<2x6xf32>
    %40 = arith.maximumf %36, %39 : vector<2x6xf32>
    %c2_44 = arith.constant 2 : index
    %c0_45 = arith.constant 0 : index
    %c0_46 = arith.constant 0 : index
    %41 = vector.load %arg3[%c2_44, %c0_45, %c0_46] : memref<3x16x6xf32, #tpu.memory_space<vmem>>, vector<1x16x6xf32>
    %42 = vector.shape_cast %41 : vector<1x16x6xf32> to vector<16x6xf32>
    %cst_47 = arith.constant dense<0.000000e+00> : vector<2x6xf32>
    %43 = tpu.matmul %33, %42, %cst_47 {dimension_numbers = #tpu.dot_dimension_numbers<[1], [0], [0], [1], [0, 0, 1, 1], [], []>} : vector<2x16xf32>, vector<16x6xf32>, vector<2x6xf32> -> vector<2x6xf32>
    %44 = arith.maximumf %40, %43 : vector<2x6xf32>
    %c0_48 = arith.constant 0 : index
    %c2_49 = arith.constant 2 : index
    %c0_50 = arith.constant 0 : index
    %45 = vector.load %arg4[%c0_48, %c2_49, %c0_50] : memref<2x6x6xf32, #tpu.memory_space<vmem>>, vector<2x1x6xf32>
    %46 = vector.shape_cast %45 : vector<2x1x6xf32> to vector<2x6xf32>
    %47 = vector.shape_cast %44 : vector<2x6xf32> to vector<2x1x6xf32>
    tpu.vector_store %arg4[%c0_48, %c2_49, %c0_50], %47 {strides = array<i32>} : memref<2x6x6xf32, #tpu.memory_space<vmem>>, vector<2x1x6xf32>,
    %c0_51 = arith.constant 0 : index
    %c9 = arith.constant 9 : index
    %c0_52 = arith.constant 0 : index
    %48 = vector.load %arg2[%c0_51, %c9, %c0_52] : memref<2x16x16xf32, #tpu.memory_space<vmem>>, vector<2x3x16xf32>
    %cst_53 = arith.constant dense<0xFF800000> : vector<2x16xf32>
    %49 = vector.multi_reduction <maximumf>, %48, %cst_53 [1] : vector<2x3x16xf32> to vector<2x16xf32>
    %c0_54 = arith.constant 0 : index
    %c0_55 = arith.constant 0 : index
    %c0_56 = arith.constant 0 : index
    %50 = vector.load %arg3[%c0_54, %c0_55, %c0_56] : memref<3x16x6xf32, #tpu.memory_space<vmem>>, vector<1x16x6xf32>
    %51 = vector.shape_cast %50 : vector<1x16x6xf32> to vector<16x6xf32>
    %cst_57 = arith.constant dense<0.000000e+00> : vector<2x6xf32>
    %52 = tpu.matmul %49, %51, %cst_57 {dimension_numbers = #tpu.dot_dimension_numbers<[1], [0], [0], [1], [0, 0, 1, 1], [], []>} : vector<2x16xf32>, vector<16x6xf32>, vector<2x6xf32> -> vector<2x6xf32>
    %c1_58 = arith.constant 1 : index
    %c0_59 = arith.constant 0 : index
    %c0_60 = arith.constant 0 : index
    %53 = vector.load %arg3[%c1_58, %c0_59, %c0_60] : memref<3x16x6xf32, #tpu.memory_space<vmem>>, vector<1x16x6xf32>
    %54 = vector.shape_cast %53 : vector<1x16x6xf32> to vector<16x6xf32>
    %cst_61 = arith.constant dense<0.000000e+00> : vector<2x6xf32>
    %55 = tpu.matmul %49, %54, %cst_61 {dimension_numbers = #tpu.dot_dimension_numbers<[1], [0], [0], [1], [0, 0, 1, 1], [], []>} : vector<2x16xf32>, vector<16x6xf32>, vector<2x6xf32> -> vector<2x6xf32>
    %56 = arith.maximumf %52, %55 : vector<2x6xf32>
    %c2_62 = arith.constant 2 : index
    %c0_63 = arith.constant 0 : index
    %c0_64 = arith.constant 0 : index
    %57 = vector.load %arg3[%c2_62, %c0_63, %c0_64] : memref<3x16x6xf32, #tpu.memory_space<vmem>>, vector<1x16x6xf32>
    %58 = vector.shape_cast %57 : vector<1x16x6xf32> to vector<16x6xf32>
    %cst_65 = arith.constant dense<0.000000e+00> : vector<2x6xf32>
    %59 = tpu.matmul %49, %58, %cst_65 {dimension_numbers = #tpu.dot_dimension_numbers<[1], [0], [0], [1], [0, 0, 1, 1], [], []>} : vector<2x16xf32>, vector<16x6xf32>, vector<2x6xf32> -> vector<2x6xf32>
    %60 = arith.maximumf %56, %59 : vector<2x6xf32>
    %c0_66 = arith.constant 0 : index
    %c3_67 = arith.constant 3 : index
    %c0_68 = arith.constant 0 : index
    %61 = vector.load %arg4[%c0_66, %c3_67, %c0_68] : memref<2x6x6xf32, #tpu.memory_space<vmem>>, vector<2x1x6xf32>
    %62 = vector.shape_cast %61 : vector<2x1x6xf32> to vector<2x6xf32>
    %63 = vector.shape_cast %60 : vector<2x6xf32> to vector<2x1x6xf32>
    tpu.vector_store %arg4[%c0_66, %c3_67, %c0_68], %63 {strides = array<i32>} : memref<2x6x6xf32, #tpu.memory_space<vmem>>, vector<2x1x6xf32>,
    %c0_69 = arith.constant 0 : index
    %c12 = arith.constant 12 : index
    %c0_70 = arith.constant 0 : index
    %64 = vector.load %arg2[%c0_69, %c12, %c0_70] : memref<2x16x16xf32, #tpu.memory_space<vmem>>, vector<2x3x16xf32>
    %cst_71 = arith.constant dense<0xFF800000> : vector<2x16xf32>
    %65 = vector.multi_reduction <maximumf>, %64, %cst_71 [1] : vector<2x3x16xf32> to vector<2x16xf32>
    %c0_72 = arith.constant 0 : index
    %c0_73 = arith.constant 0 : index
    %c0_74 = arith.constant 0 : index
    %66 = vector.load %arg3[%c0_72, %c0_73, %c0_74] : memref<3x16x6xf32, #tpu.memory_space<vmem>>, vector<1x16x6xf32>
    %67 = vector.shape_cast %66 : vector<1x16x6xf32> to vector<16x6xf32>
    %cst_75 = arith.constant dense<0.000000e+00> : vector<2x6xf32>
    %68 = tpu.matmul %65, %67, %cst_75 {dimension_numbers = #tpu.dot_dimension_numbers<[1], [0], [0], [1], [0, 0, 1, 1], [], []>} : vector<2x16xf32>, vector<16x6xf32>, vector<2x6xf32> -> vector<2x6xf32>
    %c1_76 = arith.constant 1 : index
    %c0_77 = arith.constant 0 : index
    %c0_78 = arith.constant 0 : index
    %69 = vector.load %arg3[%c1_76, %c0_77, %c0_78] : memref<3x16x6xf32, #tpu.memory_space<vmem>>, vector<1x16x6xf32>
    %70 = vector.shape_cast %69 : vector<1x16x6xf32> to vector<16x6xf32>
    %cst_79 = arith.constant dense<0.000000e+00> : vector<2x6xf32>
    %71 = tpu.matmul %65, %70, %cst_79 {dimension_numbers = #tpu.dot_dimension_numbers<[1], [0], [0], [1], [0, 0, 1, 1], [], []>} : vector<2x16xf32>, vector<16x6xf32>, vector<2x6xf32> -> vector<2x6xf32>
    %72 = arith.maximumf %68, %71 : vector<2x6xf32>
    %c2_80 = arith.constant 2 : index
    %c0_81 = arith.constant 0 : index
    %c0_82 = arith.constant 0 : index
    %73 = vector.load %arg3[%c2_80, %c0_81, %c0_82] : memref<3x16x6xf32, #tpu.memory_space<vmem>>, vector<1x16x6xf32>
    %74 = vector.shape_cast %73 : vector<1x16x6xf32> to vector<16x6xf32>
    %cst_83 = arith.constant dense<0.000000e+00> : vector<2x6xf32>
    %75 = tpu.matmul %65, %74, %cst_83 {dimension_numbers = #tpu.dot_dimension_numbers<[1], [0], [0], [1], [0, 0, 1, 1], [], []>} : vector<2x16xf32>, vector<16x6xf32>, vector<2x6xf32> -> vector<2x6xf32>
    %76 = arith.maximumf %72, %75 : vector<2x6xf32>
    %c0_84 = arith.constant 0 : index
    %c4 = arith.constant 4 : index
    %c0_85 = arith.constant 0 : index
    %77 = vector.load %arg4[%c0_84, %c4, %c0_85] : memref<2x6x6xf32, #tpu.memory_space<vmem>>, vector<2x1x6xf32>
    %78 = vector.shape_cast %77 : vector<2x1x6xf32> to vector<2x6xf32>
    %79 = vector.shape_cast %76 : vector<2x6xf32> to vector<2x1x6xf32>
    tpu.vector_store %arg4[%c0_84, %c4, %c0_85], %79 {strides = array<i32>} : memref<2x6x6xf32, #tpu.memory_space<vmem>>, vector<2x1x6xf32>,
    %c0_86 = arith.constant 0 : index
    %c15 = arith.constant 15 : index
    %c0_87 = arith.constant 0 : index
    %80 = vector.load %arg2[%c0_86, %c15, %c0_87] : memref<2x16x16xf32, #tpu.memory_space<vmem>>, vector<2x1x16xf32>
    %cst_88 = arith.constant dense<0xFF800000> : vector<2x16xf32>
    %81 = vector.multi_reduction <maximumf>, %80, %cst_88 [1] : vector<2x1x16xf32> to vector<2x16xf32>
    %c0_89 = arith.constant 0 : index
    %c0_90 = arith.constant 0 : index
    %c0_91 = arith.constant 0 : index
    %82 = vector.load %arg3[%c0_89, %c0_90, %c0_91] : memref<3x16x6xf32, #tpu.memory_space<vmem>>, vector<1x16x6xf32>
    %83 = vector.shape_cast %82 : vector<1x16x6xf32> to vector<16x6xf32>
    %cst_92 = arith.constant dense<0.000000e+00> : vector<2x6xf32>
    %84 = tpu.matmul %81, %83, %cst_92 {dimension_numbers = #tpu.dot_dimension_numbers<[1], [0], [0], [1], [0, 0, 1, 1], [], []>} : vector<2x16xf32>, vector<16x6xf32>, vector<2x6xf32> -> vector<2x6xf32>
    %c1_93 = arith.constant 1 : index
    %c0_94 = arith.constant 0 : index
    %c0_95 = arith.constant 0 : index
    %85 = vector.load %arg3[%c1_93, %c0_94, %c0_95] : memref<3x16x6xf32, #tpu.memory_space<vmem>>, vector<1x16x6xf32>
    %86 = vector.shape_cast %85 : vector<1x16x6xf32> to vector<16x6xf32>
    %cst_96 = arith.constant dense<0.000000e+00> : vector<2x6xf32>
    %87 = tpu.matmul %81, %86, %cst_96 {dimension_numbers = #tpu.dot_dimension_numbers<[1], [0], [0], [1], [0, 0, 1, 1], [], []>} : vector<2x16xf32>, vector<16x6xf32>, vector<2x6xf32> -> vector<2x6xf32>
    %88 = arith.maximumf %84, %87 : vector<2x6xf32>
    %c2_97 = arith.constant 2 : index
    %c0_98 = arith.constant 0 : index
    %c0_99 = arith.constant 0 : index
    %89 = vector.load %arg3[%c2_97, %c0_98, %c0_99] : memref<3x16x6xf32, #tpu.memory_space<vmem>>, vector<1x16x6xf32>
    %90 = vector.shape_cast %89 : vector<1x16x6xf32> to vector<16x6xf32>
    %cst_100 = arith.constant dense<0.000000e+00> : vector<2x6xf32>
    %91 = tpu.matmul %81, %90, %cst_100 {dimension_numbers = #tpu.dot_dimension_numbers<[1], [0], [0], [1], [0, 0, 1, 1], [], []>} : vector<2x16xf32>, vector<16x6xf32>, vector<2x6xf32> -> vector<2x6xf32>
    %92 = arith.maximumf %88, %91 : vector<2x6xf32>
    %c0_101 = arith.constant 0 : index
    %c5 = arith.constant 5 : index
    %c0_102 = arith.constant 0 : index
    %93 = vector.load %arg4[%c0_101, %c5, %c0_102] : memref<2x6x6xf32, #tpu.memory_space<vmem>>, vector<2x1x6xf32>
    %94 = vector.shape_cast %93 : vector<2x1x6xf32> to vector<2x6xf32>
    %95 = vector.shape_cast %92 : vector<2x6xf32> to vector<2x1x6xf32>
    tpu.vector_store %arg4[%c0_101, %c5, %c0_102], %95 {strides = array<i32>} : memref<2x6x6xf32, #tpu.memory_space<vmem>>, vector<2x1x6xf32>,
    return
  }
  func.func @transform_0(%arg0: i32, %arg1: i32) -> (i32, i32, i32) {
    %c0_i32 = arith.constant 0 : i32
    %c0_i32_0 = arith.constant 0 : i32
    return %arg0, %arg1, %c0_i32 : i32, i32, i32
  }
  func.func @transform_1(%arg0: i32, %arg1: i32) -> (i32, i32, i32) {
    %c0_i32 = arith.constant 0 : i32
    %c0_i32_0 = arith.constant 0 : i32
    %c0_i32_1 = arith.constant 0 : i32
    %c0_i32_2 = arith.constant 0 : i32
    return %c0_i32, %c0_i32_0, %c0_i32_1 : i32, i32, i32
  }
  func.func @transform_2(%arg0: i32, %arg1: i32) -> (i32, i32, i32) {
    %c0_i32 = arith.constant 0 : i32
    %c0_i32_0 = arith.constant 0 : i32
    return %arg0, %arg1, %c0_i32 : i32, i32, i32
  }
}

</mosaic_0001>

<llo_original>
// kernel: tpu_custom_call.1
$region0: #{tpu_custom_call.1}
  #allocation0 [shape = 'u32[]', space=smem, size = 0x4, offset = 0x4, fixed_abs, tag = 'smem constant byte address 0x4 - core index']
  #allocation1 [shape = 'u32[144,128]{1,0:T(1,128)}', space=vmem, size = 0x12000, scoped, tag = 'internal scratch']
  %s0 = inlined_call_operand.hbm [shape: f32[8,16,16], index: 0, kind: input, shape index: {}]
  %s1 = inlined_call_operand.vmem [shape: f32[3,16,6], index: 1, kind: input, shape index: {}]
  %s2 = inlined_call_operand.vmem [shape: f32[8,6,6], index: 2, kind: output, shape index: {}]
  %s3 = sld [smem:[#allocation0]]
  $region45: #{tpu_custom_call.1} parent=0
    _
  %s5 = ssub.s32 1, %s3
  %s6 = scalar_select 0, %s5, %s3
  $region1: #{tpu_custom_call.1} parent=0
    #allocation2 [shape = 'u8[32768]{0}', space=vmem, size = 0x8000, scoped, tag = 'input window, operand 0']
    #allocation3 [shape = 's32[2]{0}', space=sflag, size = 0x8, scoped, tag = 'scoped memory for tpu_custom_call.1']
    %7 = vsyncpa [#allocation3], 0
    %s8 = scalar_lea.sflag [#allocation3], 1
    %9 = vsyncpa %s8, 0
    loop: start=0, step=1, limit=6
    $region2: #{tpu_custom_call.1} parent=1 // loop_pre_header
      _
    $region3: #{tpu_custom_call.1} parent=1 // loop_header
      %s11 = sphi 0, %s15
      %p12 = scmp.ge.s32.totalorder %s11, 6
      %s18 = sphi 0, %s30
      %s19 = sphi 0, %s26
      %s20 = sphi 0, %s18
      %s21 = sphi 0, %s19
      %s22 = sphi 0, %s20
      %s23 = sphi 0, %s21
      %s35 = sphi 0, %s37
      %s38 = sphi 0, %s35
      %s39 = sphi 0, %s38
      %s55 = sphi 0, %s39
      %s59 = sphi 0, %s59
      %s61 = sphi 0, %s59
      %s62 = sphi 0, %s61
      %s76 = sphi 0, %s62
      %s84 = sphi 0, %s86
      %s87 = sphi 0, %s84
      %s88 = sphi 0, %s87
      %s104 = sphi 0, %s88
    $region4: #{tpu_custom_call.1} parent=1 // loop_header_branch
      %14 = sbr.rel (%p12) target = $region8
    $region5: #{tpu_custom_call.1} parent=1 // loop_body
      %s16 = ssub.s32 %s11, 1
      %s17 = ssub.s32 %s11, 2
      %s24 = sadd.s32 1, %s19
      %p25 = scmp.ge.s32.totalorder %s24, 1
      %s26 = scalar_select %p25, 0, %s24
      %s27 = sadd.s32 1, %s18
      %s28 = scalar_select %p25, %s27, %s18
      %p29 = scmp.ge.s32.totalorder %s28, 4
      %s30 = scalar_select %p29, 0, %s28
      %s31 = ssub.s32 %s18, %s30
      %s32 = ssub.s32 %s19, %s26
      %s33 = sor.u32 %s31, %s32
      %p34 = scmp.eq.s32.totalorder %s33, 0
      %s36 = sadd.s32 %s35, 1
      %s37 = scalar_select %p34, %s35, %s36
      %p40 = pneg %p34
      %p41 = scmp.eq.s32.totalorder %s11, 3
      %p42 = por %p40, %p41
      %p43 = scmp.ne.s32.totalorder %s35, %s38
      %p44 = scmp.eq.s32.totalorder %s11, 0
      %p45 = por %p43, %p44
      %p46 = scmp.ne.s32.totalorder %s35, %s38
      %p47 = scmp.eq.s32.totalorder %s16, 3
      %p48 = por %p46, %p47
      %p49 = scmp.ne.s32.totalorder %s38, %s39
      %p50 = scmp.eq.s32.totalorder %s16, 0
      %p51 = por %p49, %p50
      %p52 = scmp.ne.s32.totalorder %s38, %s39
      %p53 = scmp.eq.s32.totalorder %s17, 3
      %p54 = por %p52, %p53
      %p56 = scmp.ne.s32.totalorder %s39, %s55
      %p57 = scmp.eq.s32.totalorder %s17, 0
      %p58 = por %p56, %p57
      %s60 = sadd.s32 %s59, 1
      %p63 = scmp.eq.s32.totalorder %s11, 3
      %p64 = scmp.ne.s32.totalorder %s59, %s61
      %p65 = scmp.eq.s32.totalorder %s11, 0
      %p66 = por %p64, %p65
      %p67 = scmp.ne.s32.totalorder %s59, %s61
      %p68 = scmp.eq.s32.totalorder %s16, 3
      %p69 = por %p67, %p68
      %p70 = scmp.ne.s32.totalorder %s61, %s62
      %p71 = scmp.eq.s32.totalorder %s16, 0
      %p72 = por %p70, %p71
      %p73 = scmp.ne.s32.totalorder %s61, %s62
      %p74 = scmp.eq.s32.totalorder %s17, 3
      %p75 = por %p73, %p74
      %p77 = scmp.ne.s32.totalorder %s62, %s76
      %p78 = scmp.eq.s32.totalorder %s17, 0
      %p79 = por %p77, %p78
      %s80 = ssub.s32 %s18, %s30
      %s81 = ssub.s32 %s19, %s26
      %s82 = sor.u32 %s80, %s81
      %p83 = scmp.eq.s32.totalorder %s82, 0
      %s85 = sadd.s32 %s84, 1
      %s86 = scalar_select %p83, %s84, %s85
      %p89 = pneg %p83
      %p90 = scmp.eq.s32.totalorder %s11, 3
      %p91 = por %p89, %p90
      %p92 = scmp.ne.s32.totalorder %s84, %s87
      %p93 = scmp.eq.s32.totalorder %s11, 0
      %p94 = por %p92, %p93
      %p95 = scmp.ne.s32.totalorder %s84, %s87
      %p96 = scmp.eq.s32.totalorder %s16, 3
      %p97 = por %p95, %p96
      %p98 = scmp.ne.s32.totalorder %s87, %s88
      %p99 = scmp.eq.s32.totalorder %s16, 0
      %p100 = por %p98, %p99
      %p101 = scmp.ne.s32.totalorder %s87, %s88
      %p102 = scmp.eq.s32.totalorder %s17, 3
      %p103 = por %p101, %p102
      %p105 = scmp.ne.s32.totalorder %s88, %s104
      %p106 = scmp.eq.s32.totalorder %s17, 0
      %p107 = por %p105, %p106
      %p108 = scmp.le.s32.totalorder 1, %s11
      %p109 = scmp.lt.s32.totalorder %s11, 5
      %p110 = pnand %p108, %p109
      %p111 = pneg %p110
      // Predicated region
      $region9: #{tpu_custom_call.1} parent=5 // pred_check
        _
      $region10: #{tpu_custom_call.1} parent=5 // pred_check_branch
        %113 = sbr.rel (%p110) target = $region12
      $region11: #{tpu_custom_call.1} parent=5 // pred_region
        %s114 = ssub.s32 %s11, 1
        // Predicated region
        $region13: #{tpu_custom_call.1} parent=11 // pred_check
          %p115 = pneg %p72
        $region14: #{tpu_custom_call.1} parent=11 // pred_check_branch
          %117 = sbr.rel (%p115) target = $region16
        $region15: #{tpu_custom_call.1} parent=11 // pred_region
          _
        $region16: #{tpu_custom_call.1} parent=11 // pred_fallthru
          _
      $region12: #{tpu_custom_call.1} parent=5 // pred_fallthru
        _
      %p118 = scmp.lt.s32.totalorder %s11, 4
      // Predicated region
      $region17: #{tpu_custom_call.1} parent=5 // pred_check
        %p119 = pneg %p118
      $region18: #{tpu_custom_call.1} parent=5 // pred_check_branch
        %121 = sbr.rel (%p119) target = $region20
      $region19: #{tpu_custom_call.1} parent=5 // pred_region
        // Predicated region
        $region21: #{tpu_custom_call.1} parent=19 // pred_check
          %p122 = pneg %p45
        $region22: #{tpu_custom_call.1} parent=19 // pred_check_branch
          %124 = sbr.rel (%p122) target = $region24
        $region23: #{tpu_custom_call.1} parent=19 // pred_region
          %s125 = sand.u32 %s35, 1
          %s126 = scalar_lea.sflag [#allocation3], %s125
          %s127 = sand.u32 %s35, 1
          %s128 = smul.addr %s127, 32
          %s129 = scalar_lea.vmem [#allocation2], %s128
          %s130 = smul.u32 2, %s18
          %s131 = smul.u32 2, %s19
          %s133 = ssub.s32 512, 512
          %134 = vsyncadd %s126, %s133
          %s135 = smul.addr %s130, 2
          %s136 = sadd.s32 %s131, %s135
          %s137 = smul.addr %s136, 128
          %s138 = scalar_lea.hbm %s0, %s137
          %s139 = sshll.u32 %s129, 4
          %s140 = int_to_ptr.vmem [resolvable:$true] %s139
          %145 = dma.hbm_to_vmem [thread:$0]  %s138, 512, %s140, %s126, 128, 128, 8
        $region24: #{tpu_custom_call.1} parent=19 // pred_fallthru
          _
      $region20: #{tpu_custom_call.1} parent=5 // pred_fallthru
        _
      %p146 = scmp.le.s32.totalorder 1, %s11
      %p147 = scmp.lt.s32.totalorder %s11, 5
      %p148 = pnand %p146, %p147
      %p149 = pneg %p148
      // Predicated region
      $region25: #{tpu_custom_call.1} parent=5 // pred_check
        _
      $region26: #{tpu_custom_call.1} parent=5 // pred_check_branch
        %151 = sbr.rel (%p148) target = $region28
      $region27: #{tpu_custom_call.1} parent=5 // pred_region
        %s152 = ssub.s32 %s11, 1
        %s153 = sand.u32 %s38, 1
        %s154 = scalar_lea.sflag [#allocation3], %s153
        %s155 = sand.u32 %s38, 1
        %s156 = smul.addr %s155, 32
        %s157 = scalar_lea.vmem [#allocation2], %s156
        // Predicated region
        $region29: #{tpu_custom_call.1} parent=27 // pred_check
          %p158 = pneg %p51
        $region30: #{tpu_custom_call.1} parent=27 // pred_check_branch
          %160 = sbr.rel (%p158) target = $region32
        $region31: #{tpu_custom_call.1} parent=27 // pred_region
          %161 = dma.done %s154, 512
        $region32: #{tpu_custom_call.1} parent=27 // pred_fallthru
          _
        %s162 = sand.u32 %s38, 1
        %s163 = scalar_lea.sflag [#allocation3], %s162
        %s164 = sand.u32 %s38, 1
        %s165 = smul.addr %s164, 32
        %s166 = scalar_lea.vmem [#allocation2], %s165
        %p167 = pneg %p51
        %p168 = pneg %p48
        %p169 = pneg %p72
        %p170 = pneg %p69
        %p171 = pneg %p100
        %p172 = pneg %p97
        %s173 = smul.u32 2, %s20
        %p174 = scmp.lt.s32.totalorder %s173, 7
        %s175 = scalar_select %p174, %s173, 7
        %p176 = scmp.lt.s32.totalorder %s21, 0
        %s177 = scalar_select %p176, %s21, 0
        %s178 = sadd.s32 %s177, %s175
        %s179 = smul.addr %s178, 8
        %s180 = scalar_lea.vmem %s2, %s179
        %s181 = smul.u32 2, %s20
        %s182 = smul.u32 2, %s21
        %s183 = smul.u32 2, %s20
        %p184 = scmp.lt.s32.totalorder %s183, 7
        %s185 = scalar_select %p184, %s183, 7
        %p186 = scmp.lt.s32.totalorder %s21, 0
        %s187 = scalar_select %p186, %s21, 0
        %s188 = sadd.s32 %s187, %s185
        %s189 = smul.addr %s188, 8
        %s190 = scalar_lea.vmem %s2, %s189
        %s191 = smul.u32 2, %s20
        %v192 = vld [vmem:[%s157] sm:$0x7]
        %v193 = vld [vmem:[%s157 + $0x10] sm:$0x7]
        %vm194 = vcmask 124928
        %v195 = vsel %vm194, %v192, -inf
        %v196 = vrot.slane %v195, 4
        %v197 = vmax.f32 %v195, %v196
        %v198 = vrot.slane %v197, 2
        %v199 = vmax.f32 %v197, %v198
        %v200 = vrot.slane %v199, 1
        %v201 = vmax.f32 %v199, %v200
        %v202 = vsel %vm194, %v193, -inf
        %v203 = vrot.slane %v202, 4
        %v204 = vmax.f32 %v202, %v203
        %v205 = vrot.slane %v204, 2
        %v206 = vmax.f32 %v204, %v205
        %v207 = vrot.slane %v206, 1
        %v208 = vmax.f32 %v206, %v207
        %v209 = vld [vmem:[%s1] sm:$0xff]
        %v210 = vld [vmem:[%s1 + $0x8] sm:$0xff]
        %vm213 = vcmask 1041409
        %v214 = vsel %vm213, %v208, %v201
        %vm215 = vcmask 130048
        %v216 = vsel %vm215, %v214, 0
        %218 = vmatprep.subr.mxu0 0.0
        %219 = vmatpush1.msra.mxu0 %v209
        %220 = vmatprep.subr.mxu0 0.0
        %221 = vmatpush1.msra.mxu0 %v210
        %222 = vmatprep.subr.mxu0 0.0
        %223 = vmatpush1.msra.mxu0 0.0
        %224 = vmatprep.subr.mxu0 0.0
        %225 = vmatpush1.msra.mxu0 0.0
        %226 = vmatprep.subr.mxu0 0.0
        %227 = vmatpush1.msra.mxu0 0.0
        %228 = vmatprep.subr.mxu0 0.0
        %229 = vmatpush1.msra.mxu0 0.0
        %230 = vmatprep.subr.mxu0 0.0
        %231 = vmatpush1.msra.mxu0 0.0
        %232 = vmatprep.subr.mxu0 0.0
        %233 = vmatpush1.msra.mxu0 0.0
        %234 = vmatprep.subr.mxu0 0.0
        %235 = vmatpush1.msra.mxu0 0.0
        %236 = vmatprep.subr.mxu0 0.0
        %237 = vmatpush1.msra.mxu0 0.0
        %238 = vmatprep.subr.mxu0 0.0
        %239 = vmatpush1.msra.mxu0 0.0
        %240 = vmatprep.subr.mxu0 0.0
        %241 = vmatpush1.msra.mxu0 0.0
        %242 = vmatprep.subr.mxu0 0.0
        %243 = vmatpush1.msra.mxu0 0.0
        %244 = vmatprep.subr.mxu0 0.0
        %245 = vmatpush1.msra.mxu0 0.0
        %246 = vmatprep.subr.mxu0 0.0
        %247 = vmatpush1.msra.mxu0 0.0
        %248 = vmatprep.subr.mxu0 0.0
        %249 = vmatpush1.msra.mxu0 0.0
        %250 = vmatprep.subr.mxu0 0.0
        %251 = vmatpush1.msra.mxu0 0.0
        %252 = vmatprep.subr.mxu0 0.0
        %253 = vmatpush1.msra.mxu0 0.0
        %254 = vmatprep.subr.mxu0 0.0
        %255 = vmatpush1.msra.mxu0 0.0
        %256 = vmatprep.subr.mxu0 0.0
        %257 = vmatpush1.msra.mxu0 0.0
        %258 = vmatprep.subr.mxu0 0.0
        %259 = vmatpush1.msra.mxu0 0.0
        %260 = vmatprep.subr.mxu0 0.0
        %261 = vmatpush1.msra.mxu0 0.0
        %262 = vmatprep.subr.mxu0 0.0
        %263 = vmatpush1.msra.mxu0 0.0
        %264 = vmatprep.subr.mxu0 0.0
        %265 = vmatpush1.msra.mxu0 0.0
        %266 = vmatprep.subr.mxu0 0.0
        %267 = vmatpush1.msra.mxu0 0.0
        %268 = vmatprep.subr.mxu0 0.0
        %269 = vmatpush1.msra.mxu0 0.0
        %270 = vmatprep.subr.mxu0 0.0
        %271 = vmatpush1.msra.mxu0 0.0
        %272 = vmatprep.subr.mxu0 0.0
        %273 = vmatpush1.msra.mxu0 0.0
        %274 = vmatprep.subr.mxu0 0.0
        %275 = vmatpush1.msra.mxu0 0.0
        %276 = vmatprep.subr.mxu0 0.0
        %277 = vmatpush1.msra.mxu0 0.0
        %278 = vmatprep.subr.mxu0 0.0
        %279 = vmatpush1.msra.mxu0 0.0
        %280 = vmatprep.subr.mxu0 0.0
        %281 = vmatpush1.msra.mxu0 0.0
        %282 = vmatprep.mubr.f32.mxu0 0.0
        %283 = vmatmul.mubr.f32.gmra.mrb[0].mxu0 %v216
        %v284 = vpop.f32.mrb[0].mxu0
        %v285 = vadd.f32 0.0, %v284
        %v286 = vpop.f32.mrb[0].mxu0
        %287 = vdwg.mxu0
        %s288 = scalar_lea.vmem %s1, 16
        %v289 = vld [vmem:[%s288] sm:$0xff]
        %v290 = vld [vmem:[%s288 + $0x8] sm:$0xff]
        %291 = vmatprep.subr.mxu0 0.0
        %292 = vmatpush1.msra.mxu0 %v289
        %293 = vmatprep.subr.mxu0 0.0
        %294 = vmatpush1.msra.mxu0 %v290
        %295 = vmatprep.subr.mxu0 0.0
        %296 = vmatpush1.msra.mxu0 0.0
        %297 = vmatprep.subr.mxu0 0.0
        %298 = vmatpush1.msra.mxu0 0.0
        %299 = vmatprep.subr.mxu0 0.0
        %300 = vmatpush1.msra.mxu0 0.0
        %301 = vmatprep.subr.mxu0 0.0
        %302 = vmatpush1.msra.mxu0 0.0
        %303 = vmatprep.subr.mxu0 0.0
        %304 = vmatpush1.msra.mxu0 0.0
        %305 = vmatprep.subr.mxu0 0.0
        %306 = vmatpush1.msra.mxu0 0.0
        %307 = vmatprep.subr.mxu0 0.0
        %308 = vmatpush1.msra.mxu0 0.0
        %309 = vmatprep.subr.mxu0 0.0
        %310 = vmatpush1.msra.mxu0 0.0
        %311 = vmatprep.subr.mxu0 0.0
        %312 = vmatpush1.msra.mxu0 0.0
        %313 = vmatprep.subr.mxu0 0.0
        %314 = vmatpush1.msra.mxu0 0.0
        %315 = vmatprep.subr.mxu0 0.0
        %316 = vmatpush1.msra.mxu0 0.0
        %317 = vmatprep.subr.mxu0 0.0
        %318 = vmatpush1.msra.mxu0 0.0
        %319 = vmatprep.subr.mxu0 0.0
        %320 = vmatpush1.msra.mxu0 0.0
        %321 = vmatprep.subr.mxu0 0.0
        %322 = vmatpush1.msra.mxu0 0.0
        %323 = vmatprep.subr.mxu0 0.0
        %324 = vmatpush1.msra.mxu0 0.0
        %325 = vmatprep.subr.mxu0 0.0
        %326 = vmatpush1.msra.mxu0 0.0
        %327 = vmatprep.subr.mxu0 0.0
        %328 = vmatpush1.msra.mxu0 0.0
        %329 = vmatprep.subr.mxu0 0.0
        %330 = vmatpush1.msra.mxu0 0.0
        %331 = vmatprep.subr.mxu0 0.0
        %332 = vmatpush1.msra.mxu0 0.0
        %333 = vmatprep.subr.mxu0 0.0
        %334 = vmatpush1.msra.mxu0 0.0
        %335 = vmatprep.subr.mxu0 0.0
        %336 = vmatpush1.msra.mxu0 0.0
        %337 = vmatprep.subr.mxu0 0.0
        %338 = vmatpush1.msra.mxu0 0.0
        %339 = vmatprep.subr.mxu0 0.0
        %340 = vmatpush1.msra.mxu0 0.0
        %341 = vmatprep.subr.mxu0 0.0
        %342 = vmatpush1.msra.mxu0 0.0
        %343 = vmatprep.subr.mxu0 0.0
        %344 = vmatpush1.msra.mxu0 0.0
        %345 = vmatprep.subr.mxu0 0.0
        %346 = vmatpush1.msra.mxu0 0.0
        %347 = vmatprep.subr.mxu0 0.0
        %348 = vmatpush1.msra.mxu0 0.0
        %349 = vmatprep.subr.mxu0 0.0
        %350 = vmatpush1.msra.mxu0 0.0
        %351 = vmatprep.subr.mxu0 0.0
        %352 = vmatpush1.msra.mxu0 0.0
        %353 = vmatprep.subr.mxu0 0.0
        %354 = vmatpush1.msra.mxu0 0.0
        %355 = vmatprep.mubr.f32.mxu0 0.0
        %356 = vmatmul.mubr.f32.gmra.mrb[0].mxu0 %v216
        %v357 = vpop.f32.mrb[0].mxu0
        %v358 = vadd.f32 0.0, %v357
        %v359 = vpop.f32.mrb[0].mxu0
        %360 = vdwg.mxu0
        %v361 = vmax.f32 %v285, %v358
        %s362 = scalar_lea.vmem %s1, 32
        %v363 = vld [vmem:[%s362] sm:$0xff]
        %v364 = vld [vmem:[%s362 + $0x8] sm:$0xff]
        %365 = vmatprep.subr.mxu0 0.0
        %366 = vmatpush1.msra.mxu0 %v363
        %367 = vmatprep.subr.mxu0 0.0
        %368 = vmatpush1.msra.mxu0 %v364
        %369 = vmatprep.subr.mxu0 0.0
        %370 = vmatpush1.msra.mxu0 0.0
        %371 = vmatprep.subr.mxu0 0.0
        %372 = vmatpush1.msra.mxu0 0.0
        %373 = vmatprep.subr.mxu0 0.0
        %374 = vmatpush1.msra.mxu0 0.0
        %375 = vmatprep.subr.mxu0 0.0
        %376 = vmatpush1.msra.mxu0 0.0
        %377 = vmatprep.subr.mxu0 0.0
        %378 = vmatpush1.msra.mxu0 0.0
        %379 = vmatprep.subr.mxu0 0.0
        %380 = vmatpush1.msra.mxu0 0.0
        %381 = vmatprep.subr.mxu0 0.0
        %382 = vmatpush1.msra.mxu0 0.0
        %383 = vmatprep.subr.mxu0 0.0
        %384 = vmatpush1.msra.mxu0 0.0
        %385 = vmatprep.subr.mxu0 0.0
        %386 = vmatpush1.msra.mxu0 0.0
        %387 = vmatprep.subr.mxu0 0.0
        %388 = vmatpush1.msra.mxu0 0.0
        %389 = vmatprep.subr.mxu0 0.0
        %390 = vmatpush1.msra.mxu0 0.0
        %391 = vmatprep.subr.mxu0 0.0
        %392 = vmatpush1.msra.mxu0 0.0
        %393 = vmatprep.subr.mxu0 0.0
        %394 = vmatpush1.msra.mxu0 0.0
        %395 = vmatprep.subr.mxu0 0.0
        %396 = vmatpush1.msra.mxu0 0.0
        %397 = vmatprep.subr.mxu0 0.0
        %398 = vmatpush1.msra.mxu0 0.0
        %399 = vmatprep.subr.mxu0 0.0
        %400 = vmatpush1.msra.mxu0 0.0
        %401 = vmatprep.subr.mxu0 0.0
        %402 = vmatpush1.msra.mxu0 0.0
        %403 = vmatprep.subr.mxu0 0.0
        %404 = vmatpush1.msra.mxu0 0.0
        %405 = vmatprep.subr.mxu0 0.0
        %406 = vmatpush1.msra.mxu0 0.0
        %407 = vmatprep.subr.mxu0 0.0
        %408 = vmatpush1.msra.mxu0 0.0
        %409 = vmatprep.subr.mxu0 0.0
        %410 = vmatpush1.msra.mxu0 0.0
        %411 = vmatprep.subr.mxu0 0.0
        %412 = vmatpush1.msra.mxu0 0.0
        %413 = vmatprep.subr.mxu0 0.0
        %414 = vmatpush1.msra.mxu0 0.0
        %415 = vmatprep.subr.mxu0 0.0
        %416 = vmatpush1.msra.mxu0 0.0
        %417 = vmatprep.subr.mxu0 0.0
        %418 = vmatpush1.msra.mxu0 0.0
        %419 = vmatprep.subr.mxu0 0.0
        %420 = vmatpush1.msra.mxu0 0.0
        %421 = vmatprep.subr.mxu0 0.0
        %422 = vmatpush1.msra.mxu0 0.0
        %423 = vmatprep.subr.mxu0 0.0
        %424 = vmatpush1.msra.mxu0 0.0
        %425 = vmatprep.subr.mxu0 0.0
        %426 = vmatpush1.msra.mxu0 0.0
        %427 = vmatprep.subr.mxu0 0.0
        %428 = vmatpush1.msra.mxu0 0.0
        %429 = vmatprep.mubr.f32.mxu0 0.0
        %430 = vmatmul.mubr.f32.gmra.mrb[0].mxu0 %v216
        %v431 = vpop.f32.mrb[0].mxu0
        %v432 = vadd.f32 0.0, %v431
        %v433 = vpop.f32.mrb[0].mxu0
        %434 = vdwg.mxu0
        %v435 = vmax.f32 %v361, %v432
        %v438 = vunpack.c.l.s4 1966171168
        %v439 = vunpack.c.0.s8 %v438
        %v440 = vlaneseq
        %v441 = vshrl.u32 %v440, 7
        %v442 = vsub.s32 %v439, %v441
        %v443 = vrot.slane %v435, %v442
        %v444 = vcombine.high %v443, %v443
        %v446 = vunpack.c.l.s4 1966171168
        %v447 = vunpack.c.0.s8 %v446
        %v448 = vlaneseq
        %v449 = vshrl.u32 %v448, 7
        %v450 = vsub.s32 %v447, %v449
        %v451 = vrot.slane %v443, %v450
        %v453 = vunpack.c.l.s4 1966171168
        %v454 = vunpack.c.0.s8 %v453
        %v455 = vlaneseq
        %v456 = vshrl.u32 %v455, 7
        %v457 = vsub.s32 %v454, %v456
        %v458 = vrot.slane %v444, %v457
        %vm461 = vcmask 40960
        %462 = vst.msk [vmem:[%s190] sm:$0x1] %vm461, %v451
        %463 = vst.msk [vmem:[%s190 + $0x8] sm:$0x1] %vm461, %v458
        %v464 = vld [vmem:[%s157 + $0x3] sm:$0x7]
        %v465 = vld [vmem:[%s157 + $0x13] sm:$0x7]
        %v466 = vsel %vm194, %v464, -inf
        %v467 = vrot.slane %v466, 4
        %v468 = vmax.f32 %v466, %v467
        %v469 = vrot.slane %v468, 2
        %v470 = vmax.f32 %v468, %v469
        %v471 = vrot.slane %v470, 1
        %v472 = vmax.f32 %v470, %v471
        %v473 = vsel %vm194, %v465, -inf
        %v474 = vrot.slane %v473, 4
        %v475 = vmax.f32 %v473, %v474
        %v476 = vrot.slane %v475, 2
        %v477 = vmax.f32 %v475, %v476
        %v478 = vrot.slane %v477, 1
        %v479 = vmax.f32 %v477, %v478
        %v480 = vld [vmem:[%s1] sm:$0xff]
        %v481 = vld [vmem:[%s1 + $0x8] sm:$0xff]
        %v484 = vsel %vm213, %v479, %v472
        %v485 = vsel %vm215, %v484, 0
        %487 = vmatprep.subr.mxu0 0.0
        %488 = vmatpush1.msra.mxu0 %v480
        %489 = vmatprep.subr.mxu0 0.0
        %490 = vmatpush1.msra.mxu0 %v481
        %491 = vmatprep.subr.mxu0 0.0
        %492 = vmatpush1.msra.mxu0 0.0
        %493 = vmatprep.subr.mxu0 0.0
        %494 = vmatpush1.msra.mxu0 0.0
        %495 = vmatprep.subr.mxu0 0.0
        %496 = vmatpush1.msra.mxu0 0.0
        %497 = vmatprep.subr.mxu0 0.0
        %498 = vmatpush1.msra.mxu0 0.0
        %499 = vmatprep.subr.mxu0 0.0
        %500 = vmatpush1.msra.mxu0 0.0
        %501 = vmatprep.subr.mxu0 0.0
        %502 = vmatpush1.msra.mxu0 0.0
        %503 = vmatprep.subr.mxu0 0.0
        %504 = vmatpush1.msra.mxu0 0.0
        %505 = vmatprep.subr.mxu0 0.0
        %506 = vmatpush1.msra.mxu0 0.0
        %507 = vmatprep.subr.mxu0 0.0
        %508 = vmatpush1.msra.mxu0 0.0
        %509 = vmatprep.subr.mxu0 0.0
        %510 = vmatpush1.msra.mxu0 0.0
        %511 = vmatprep.subr.mxu0 0.0
        %512 = vmatpush1.msra.mxu0 0.0
        %513 = vmatprep.subr.mxu0 0.0
        %514 = vmatpush1.msra.mxu0 0.0
        %515 = vmatprep.subr.mxu0 0.0
        %516 = vmatpush1.msra.mxu0 0.0
        %517 = vmatprep.subr.mxu0 0.0
        %518 = vmatpush1.msra.mxu0 0.0
        %519 = vmatprep.subr.mxu0 0.0
        %520 = vmatpush1.msra.mxu0 0.0
        %521 = vmatprep.subr.mxu0 0.0
        %522 = vmatpush1.msra.mxu0 0.0
        %523 = vmatprep.subr.mxu0 0.0
        %524 = vmatpush1.msra.mxu0 0.0
        %525 = vmatprep.subr.mxu0 0.0
        %526 = vmatpush1.msra.mxu0 0.0
        %527 = vmatprep.subr.mxu0 0.0
        %528 = vmatpush1.msra.mxu0 0.0
        %529 = vmatprep.subr.mxu0 0.0
        %530 = vmatpush1.msra.mxu0 0.0
        %531 = vmatprep.subr.mxu0 0.0
        %532 = vmatpush1.msra.mxu0 0.0
        %533 = vmatprep.subr.mxu0 0.0
        %534 = vmatpush1.msra.mxu0 0.0
        %535 = vmatprep.subr.mxu0 0.0
        %536 = vmatpush1.msra.mxu0 0.0
        %537 = vmatprep.subr.mxu0 0.0
        %538 = vmatpush1.msra.mxu0 0.0
        %539 = vmatprep.subr.mxu0 0.0
        %540 = vmatpush1.msra.mxu0 0.0
        %541 = vmatprep.subr.mxu0 0.0
        %542 = vmatpush1.msra.mxu0 0.0
        %543 = vmatprep.subr.mxu0 0.0
        %544 = vmatpush1.msra.mxu0 0.0
        %545 = vmatprep.subr.mxu0 0.0
        %546 = vmatpush1.msra.mxu0 0.0
        %547 = vmatprep.subr.mxu0 0.0
        %548 = vmatpush1.msra.mxu0 0.0
        %549 = vmatprep.subr.mxu0 0.0
        %550 = vmatpush1.msra.mxu0 0.0
        %551 = vmatprep.mubr.f32.mxu0 0.0
        %552 = vmatmul.mubr.f32.gmra.mrb[0].mxu0 %v485
        %v553 = vpop.f32.mrb[0].mxu0
        %v554 = vadd.f32 0.0, %v553
        %v555 = vpop.f32.mrb[0].mxu0
        %556 = vdwg.mxu0
        %v557 = vld [vmem:[%s288] sm:$0xff]
        %v558 = vld [vmem:[%s288 + $0x8] sm:$0xff]
        %559 = vmatprep.subr.mxu0 0.0
        %560 = vmatpush1.msra.mxu0 %v557
        %561 = vmatprep.subr.mxu0 0.0
        %562 = vmatpush1.msra.mxu0 %v558
        %563 = vmatprep.subr.mxu0 0.0
        %564 = vmatpush1.msra.mxu0 0.0
        %565 = vmatprep.subr.mxu0 0.0
        %566 = vmatpush1.msra.mxu0 0.0
        %567 = vmatprep.subr.mxu0 0.0
        %568 = vmatpush1.msra.mxu0 0.0
        %569 = vmatprep.subr.mxu0 0.0
        %570 = vmatpush1.msra.mxu0 0.0
        %571 = vmatprep.subr.mxu0 0.0
        %572 = vmatpush1.msra.mxu0 0.0
        %573 = vmatprep.subr.mxu0 0.0
        %574 = vmatpush1.msra.mxu0 0.0
        %575 = vmatprep.subr.mxu0 0.0
        %576 = vmatpush1.msra.mxu0 0.0
        %577 = vmatprep.subr.mxu0 0.0
        %578 = vmatpush1.msra.mxu0 0.0
        %579 = vmatprep.subr.mxu0 0.0
        %580 = vmatpush1.msra.mxu0 0.0
        %581 = vmatprep.subr.mxu0 0.0
        %582 = vmatpush1.msra.mxu0 0.0
        %583 = vmatprep.subr.mxu0 0.0
        %584 = vmatpush1.msra.mxu0 0.0
        %585 = vmatprep.subr.mxu0 0.0
        %586 = vmatpush1.msra.mxu0 0.0
        %587 = vmatprep.subr.mxu0 0.0
        %588 = vmatpush1.msra.mxu0 0.0
        %589 = vmatprep.subr.mxu0 0.0
        %590 = vmatpush1.msra.mxu0 0.0
        %591 = vmatprep.subr.mxu0 0.0
        %592 = vmatpush1.msra.mxu0 0.0
        %593 = vmatprep.subr.mxu0 0.0
        %594 = vmatpush1.msra.mxu0 0.0
        %595 = vmatprep.subr.mxu0 0.0
        %596 = vmatpush1.msra.mxu0 0.0
        %597 = vmatprep.subr.mxu0 0.0
        %598 = vmatpush1.msra.mxu0 0.0
        %599 = vmatprep.subr.mxu0 0.0
        %600 = vmatpush1.msra.mxu0 0.0
        %601 = vmatprep.subr.mxu0 0.0
        %602 = vmatpush1.msra.mxu0 0.0
        %603 = vmatprep.subr.mxu0 0.0
        %604 = vmatpush1.msra.mxu0 0.0
        %605 = vmatprep.subr.mxu0 0.0
        %606 = vmatpush1.msra.mxu0 0.0
        %607 = vmatprep.subr.mxu0 0.0
        %608 = vmatpush1.msra.mxu0 0.0
        %609 = vmatprep.subr.mxu0 0.0
        %610 = vmatpush1.msra.mxu0 0.0
        %611 = vmatprep.subr.mxu0 0.0
        %612 = vmatpush1.msra.mxu0 0.0
        %613 = vmatprep.subr.mxu0 0.0
        %614 = vmatpush1.msra.mxu0 0.0
        %615 = vmatprep.subr.mxu0 0.0
        %616 = vmatpush1.msra.mxu0 0.0
        %617 = vmatprep.subr.mxu0 0.0
        %618 = vmatpush1.msra.mxu0 0.0
        %619 = vmatprep.subr.mxu0 0.0
        %620 = vmatpush1.msra.mxu0 0.0
        %621 = vmatprep.subr.mxu0 0.0
        %622 = vmatpush1.msra.mxu0 0.0
        %623 = vmatprep.mubr.f32.mxu0 0.0
        %624 = vmatmul.mubr.f32.gmra.mrb[0].mxu0 %v485
        %v625 = vpop.f32.mrb[0].mxu0
        %v626 = vadd.f32 0.0, %v625
        %v627 = vpop.f32.mrb[0].mxu0
        %628 = vdwg.mxu0
        %v629 = vmax.f32 %v554, %v626
        %v630 = vld [vmem:[%s362] sm:$0xff]
        %v631 = vld [vmem:[%s362 + $0x8] sm:$0xff]
        %632 = vmatprep.subr.mxu0 0.0
        %633 = vmatpush1.msra.mxu0 %v630
        %634 = vmatprep.subr.mxu0 0.0
        %635 = vmatpush1.msra.mxu0 %v631
        %636 = vmatprep.subr.mxu0 0.0
        %637 = vmatpush1.msra.mxu0 0.0
        %638 = vmatprep.subr.mxu0 0.0
        %639 = vmatpush1.msra.mxu0 0.0
        %640 = vmatprep.subr.mxu0 0.0
        %641 = vmatpush1.msra.mxu0 0.0
        %642 = vmatprep.subr.mxu0 0.0
        %643 = vmatpush1.msra.mxu0 0.0
        %644 = vmatprep.subr.mxu0 0.0
        %645 = vmatpush1.msra.mxu0 0.0
        %646 = vmatprep.subr.mxu0 0.0
        %647 = vmatpush1.msra.mxu0 0.0
        %648 = vmatprep.subr.mxu0 0.0
        %649 = vmatpush1.msra.mxu0 0.0
        %650 = vmatprep.subr.mxu0 0.0
        %651 = vmatpush1.msra.mxu0 0.0
        %652 = vmatprep.subr.mxu0 0.0
        %653 = vmatpush1.msra.mxu0 0.0
        %654 = vmatprep.subr.mxu0 0.0
        %655 = vmatpush1.msra.mxu0 0.0
        %656 = vmatprep.subr.mxu0 0.0
        %657 = vmatpush1.msra.mxu0 0.0
        %658 = vmatprep.subr.mxu0 0.0
        %659 = vmatpush1.msra.mxu0 0.0
        %660 = vmatprep.subr.mxu0 0.0
        %661 = vmatpush1.msra.mxu0 0.0
        %662 = vmatprep.subr.mxu0 0.0
        %663 = vmatpush1.msra.mxu0 0.0
        %664 = vmatprep.subr.mxu0 0.0
        %665 = vmatpush1.msra.mxu0 0.0
        %666 = vmatprep.subr.mxu0 0.0
        %667 = vmatpush1.msra.mxu0 0.0
        %668 = vmatprep.subr.mxu0 0.0
        %669 = vmatpush1.msra.mxu0 0.0
        %670 = vmatprep.subr.mxu0 0.0
        %671 = vmatpush1.msra.mxu0 0.0
        %672 = vmatprep.subr.mxu0 0.0
        %673 = vmatpush1.msra.mxu0 0.0
        %674 = vmatprep.subr.mxu0 0.0
        %675 = vmatpush1.msra.mxu0 0.0
        %676 = vmatprep.subr.mxu0 0.0
        %677 = vmatpush1.msra.mxu0 0.0
        %678 = vmatprep.subr.mxu0 0.0
        %679 = vmatpush1.msra.mxu0 0.0
        %680 = vmatprep.subr.mxu0 0.0
        %681 = vmatpush1.msra.mxu0 0.0
        %682 = vmatprep.subr.mxu0 0.0
        %683 = vmatpush1.msra.mxu0 0.0
        %684 = vmatprep.subr.mxu0 0.0
        %685 = vmatpush1.msra.mxu0 0.0
        %686 = vmatprep.subr.mxu0 0.0
        %687 = vmatpush1.msra.mxu0 0.0
        %688 = vmatprep.subr.mxu0 0.0
        %689 = vmatpush1.msra.mxu0 0.0
        %690 = vmatprep.subr.mxu0 0.0
        %691 = vmatpush1.msra.mxu0 0.0
        %692 = vmatprep.subr.mxu0 0.0
        %693 = vmatpush1.msra.mxu0 0.0
        %694 = vmatprep.subr.mxu0 0.0
        %695 = vmatpush1.msra.mxu0 0.0
        %696 = vmatprep.mubr.f32.mxu0 0.0
        %697 = vmatmul.mubr.f32.gmra.mrb[0].mxu0 %v485
        %v698 = vpop.f32.mrb[0].mxu0
        %v699 = vadd.f32 0.0, %v698
        %v700 = vpop.f32.mrb[0].mxu0
        %701 = vdwg.mxu0
        %v702 = vmax.f32 %v629, %v699
        %v705 = vunpack.c.l.s4 1966171168
        %v706 = vunpack.c.0.s8 %v705
        %v707 = vlaneseq
        %v708 = vshrl.u32 %v707, 7
        %v709 = vsub.s32 %v706, %v708
        %v710 = vrot.slane %v702, %v709
        %v711 = vcombine.high %v710, %v710
        %v713 = vunpack.c.l.s4 1966171168
        %v714 = vunpack.c.0.s8 %v713
        %v715 = vlaneseq
        %v716 = vshrl.u32 %v715, 7
        %v717 = vsub.s32 %v714, %v716
        %v718 = vrot.slane %v710, %v717
        %v720 = vunpack.c.l.s4 1966171168
        %v721 = vunpack.c.0.s8 %v720
        %v722 = vlaneseq
        %v723 = vshrl.u32 %v722, 7
        %v724 = vsub.s32 %v721, %v723
        %v725 = vrot.slane %v711, %v724
        %728 = vst.msk [vmem:[%s190 + $0x1] sm:$0x1] %vm461, %v718
        %729 = vst.msk [vmem:[%s190 + $0x9] sm:$0x1] %vm461, %v725
        %v730 = vld [vmem:[%s157 + $0x6] sm:$0x7]
        %v731 = vld [vmem:[%s157 + $0x16] sm:$0x7]
        %v732 = vsel %vm194, %v730, -inf
        %v733 = vrot.slane %v732, 4
        %v734 = vmax.f32 %v732, %v733
        %v735 = vrot.slane %v734, 2
        %v736 = vmax.f32 %v734, %v735
        %v737 = vrot.slane %v736, 1
        %v738 = vmax.f32 %v736, %v737
        %v739 = vsel %vm194, %v731, -inf
        %v740 = vrot.slane %v739, 4
        %v741 = vmax.f32 %v739, %v740
        %v742 = vrot.slane %v741, 2
        %v743 = vmax.f32 %v741, %v742
        %v744 = vrot.slane %v743, 1
        %v745 = vmax.f32 %v743, %v744
        %v746 = vld [vmem:[%s1] sm:$0xff]
        %v747 = vld [vmem:[%s1 + $0x8] sm:$0xff]
        %v750 = vsel %vm213, %v745, %v738
        %v751 = vsel %vm215, %v750, 0
        %753 = vmatprep.subr.mxu0 0.0
        %754 = vmatpush1.msra.mxu0 %v746
        %755 = vmatprep.subr.mxu0 0.0
        %756 = vmatpush1.msra.mxu0 %v747
        %757 = vmatprep.subr.mxu0 0.0
        %758 = vmatpush1.msra.mxu0 0.0
        %759 = vmatprep.subr.mxu0 0.0
        %760 = vmatpush1.msra.mxu0 0.0
        %761 = vmatprep.subr.mxu0 0.0
        %762 = vmatpush1.msra.mxu0 0.0
        %763 = vmatprep.subr.mxu0 0.0
        %764 = vmatpush1.msra.mxu0 0.0
        %765 = vmatprep.subr.mxu0 0.0
        %766 = vmatpush1.msra.mxu0 0.0
        %767 = vmatprep.subr.mxu0 0.0
        %768 = vmatpush1.msra.mxu0 0.0
        %769 = vmatprep.subr.mxu0 0.0
        %770 = vmatpush1.msra.mxu0 0.0
        %771 = vmatprep.subr.mxu0 0.0
        %772 = vmatpush1.msra.mxu0 0.0
        %773 = vmatprep.subr.mxu0 0.0
        %774 = vmatpush1.msra.mxu0 0.0
        %775 = vmatprep.subr.mxu0 0.0
        %776 = vmatpush1.msra.mxu0 0.0
        %777 = vmatprep.subr.mxu0 0.0
        %778 = vmatpush1.msra.mxu0 0.0
        %779 = vmatprep.subr.mxu0 0.0
        %780 = vmatpush1.msra.mxu0 0.0
        %781 = vmatprep.subr.mxu0 0.0
        %782 = vmatpush1.msra.mxu0 0.0
        %783 = vmatprep.subr.mxu0 0.0
        %784 = vmatpush1.msra.mxu0 0.0
        %785 = vmatprep.subr.mxu0 0.0
        %786 = vmatpush1.msra.mxu0 0.0
        %787 = vmatprep.subr.mxu0 0.0
        %788 = vmatpush1.msra.mxu0 0.0
        %789 = vmatprep.subr.mxu0 0.0
        %790 = vmatpush1.msra.mxu0 0.0
        %791 = vmatprep.subr.mxu0 0.0
        %792 = vmatpush1.msra.mxu0 0.0
        %793 = vmatprep.subr.mxu0 0.0
        %794 = vmatpush1.msra.mxu0 0.0
        %795 = vmatprep.subr.mxu0 0.0
        %796 = vmatpush1.msra.mxu0 0.0
        %797 = vmatprep.subr.mxu0 0.0
        %798 = vmatpush1.msra.mxu0 0.0
        %799 = vmatprep.subr.mxu0 0.0
        %800 = vmatpush1.msra.mxu0 0.0
        %801 = vmatprep.subr.mxu0 0.0
        %802 = vmatpush1.msra.mxu0 0.0
        %803 = vmatprep.subr.mxu0 0.0
        %804 = vmatpush1.msra.mxu0 0.0
        %805 = vmatprep.subr.mxu0 0.0
        %806 = vmatpush1.msra.mxu0 0.0
        %807 = vmatprep.subr.mxu0 0.0
        %808 = vmatpush1.msra.mxu0 0.0
        %809 = vmatprep.subr.mxu0 0.0
        %810 = vmatpush1.msra.mxu0 0.0
        %811 = vmatprep.subr.mxu0 0.0
        %812 = vmatpush1.msra.mxu0 0.0
        %813 = vmatprep.subr.mxu0 0.0
        %814 = vmatpush1.msra.mxu0 0.0
        %815 = vmatprep.subr.mxu0 0.0
        %816 = vmatpush1.msra.mxu0 0.0
        %817 = vmatprep.mubr.f32.mxu0 0.0
        %818 = vmatmul.mubr.f32.gmra.mrb[0].mxu0 %v751
        %v819 = vpop.f32.mrb[0].mxu0
        %v820 = vadd.f32 0.0, %v819
        %v821 = vpop.f32.mrb[0].mxu0
        %822 = vdwg.mxu0
        %v823 = vld [vmem:[%s288] sm:$0xff]
        %v824 = vld [vmem:[%s288 + $0x8] sm:$0xff]
        %825 = vmatprep.subr.mxu0 0.0
        %826 = vmatpush1.msra.mxu0 %v823
        %827 = vmatprep.subr.mxu0 0.0
        %828 = vmatpush1.msra.mxu0 %v824
        %829 = vmatprep.subr.mxu0 0.0
        %830 = vmatpush1.msra.mxu0 0.0
        %831 = vmatprep.subr.mxu0 0.0
        %832 = vmatpush1.msra.mxu0 0.0
        %833 = vmatprep.subr.mxu0 0.0
        %834 = vmatpush1.msra.mxu0 0.0
        %835 = vmatprep.subr.mxu0 0.0
        %836 = vmatpush1.msra.mxu0 0.0
        %837 = vmatprep.subr.mxu0 0.0
        %838 = vmatpush1.msra.mxu0 0.0
        %839 = vmatprep.subr.mxu0 0.0
        %840 = vmatpush1.msra.mxu0 0.0
        %841 = vmatprep.subr.mxu0 0.0
        %842 = vmatpush1.msra.mxu0 0.0
        %843 = vmatprep.subr.mxu0 0.0
        %844 = vmatpush1.msra.mxu0 0.0
        %845 = vmatprep.subr.mxu0 0.0
        %846 = vmatpush1.msra.mxu0 0.0
        %847 = vmatprep.subr.mxu0 0.0
        %848 = vmatpush1.msra.mxu0 0.0
        %849 = vmatprep.subr.mxu0 0.0
        %850 = vmatpush1.msra.mxu0 0.0
        %851 = vmatprep.subr.mxu0 0.0
        %852 = vmatpush1.msra.mxu0 0.0
        %853 = vmatprep.subr.mxu0 0.0
        %854 = vmatpush1.msra.mxu0 0.0
        %855 = vmatprep.subr.mxu0 0.0
        %856 = vmatpush1.msra.mxu0 0.0
        %857 = vmatprep.subr.mxu0 0.0
        %858 = vmatpush1.msra.mxu0 0.0
        %859 = vmatprep.subr.mxu0 0.0
        %860 = vmatpush1.msra.mxu0 0.0
        %861 = vmatprep.subr.mxu0 0.0
        %862 = vmatpush1.msra.mxu0 0.0
        %863 = vmatprep.subr.mxu0 0.0
        %864 = vmatpush1.msra.mxu0 0.0
        %865 = vmatprep.subr.mxu0 0.0
        %866 = vmatpush1.msra.mxu0 0.0
        %867 = vmatprep.subr.mxu0 0.0
        %868 = vmatpush1.msra.mxu0 0.0
        %869 = vmatprep.subr.mxu0 0.0
        %870 = vmatpush1.msra.mxu0 0.0
        %871 = vmatprep.subr.mxu0 0.0
        %872 = vmatpush1.msra.mxu0 0.0
        %873 = vmatprep.subr.mxu0 0.0
        %874 = vmatpush1.msra.mxu0 0.0
        %875 = vmatprep.subr.mxu0 0.0
        %876 = vmatpush1.msra.mxu0 0.0
        %877 = vmatprep.subr.mxu0 0.0
        %878 = vmatpush1.msra.mxu0 0.0
        %879 = vmatprep.subr.mxu0 0.0
        %880 = vmatpush1.msra.mxu0 0.0
        %881 = vmatprep.subr.mxu0 0.0
        %882 = vmatpush1.msra.mxu0 0.0
        %883 = vmatprep.subr.mxu0 0.0
        %884 = vmatpush1.msra.mxu0 0.0
        %885 = vmatprep.subr.mxu0 0.0
        %886 = vmatpush1.msra.mxu0 0.0
        %887 = vmatprep.subr.mxu0 0.0
        %888 = vmatpush1.msra.mxu0 0.0
        %889 = vmatprep.mubr.f32.mxu0 0.0
        %890 = vmatmul.mubr.f32.gmra.mrb[0].mxu0 %v751
        %v891 = vpop.f32.mrb[0].mxu0
        %v892 = vadd.f32 0.0, %v891
        %v893 = vpop.f32.mrb[0].mxu0
        %894 = vdwg.mxu0
        %v895 = vmax.f32 %v820, %v892
        %v896 = vld [vmem:[%s362] sm:$0xff]
        %v897 = vld [vmem:[%s362 + $0x8] sm:$0xff]
        %898 = vmatprep.subr.mxu0 0.0
        %899 = vmatpush1.msra.mxu0 %v896
        %900 = vmatprep.subr.mxu0 0.0
        %901 = vmatpush1.msra.mxu0 %v897
        %902 = vmatprep.subr.mxu0 0.0
        %903 = vmatpush1.msra.mxu0 0.0
        %904 = vmatprep.subr.mxu0 0.0
        %905 = vmatpush1.msra.mxu0 0.0
        %906 = vmatprep.subr.mxu0 0.0
        %907 = vmatpush1.msra.mxu0 0.0
        %908 = vmatprep.subr.mxu0 0.0
        %909 = vmatpush1.msra.mxu0 0.0
        %910 = vmatprep.subr.mxu0 0.0
        %911 = vmatpush1.msra.mxu0 0.0
        %912 = vmatprep.subr.mxu0 0.0
        %913 = vmatpush1.msra.mxu0 0.0
        %914 = vmatprep.subr.mxu0 0.0
        %915 = vmatpush1.msra.mxu0 0.0
        %916 = vmatprep.subr.mxu0 0.0
        %917 = vmatpush1.msra.mxu0 0.0
        %918 = vmatprep.subr.mxu0 0.0
        %919 = vmatpush1.msra.mxu0 0.0
        %920 = vmatprep.subr.mxu0 0.0
        %921 = vmatpush1.msra.mxu0 0.0
        %922 = vmatprep.subr.mxu0 0.0
        %923 = vmatpush1.msra.mxu0 0.0
        %924 = vmatprep.subr.mxu0 0.0
        %925 = vmatpush1.msra.mxu0 0.0
        %926 = vmatprep.subr.mxu0 0.0
        %927 = vmatpush1.msra.mxu0 0.0
        %928 = vmatprep.subr.mxu0 0.0
        %929 = vmatpush1.msra.mxu0 0.0
        %930 = vmatprep.subr.mxu0 0.0
        %931 = vmatpush1.msra.mxu0 0.0
        %932 = vmatprep.subr.mxu0 0.0
        %933 = vmatpush1.msra.mxu0 0.0
        %934 = vmatprep.subr.mxu0 0.0
        %935 = vmatpush1.msra.mxu0 0.0
        %936 = vmatprep.subr.mxu0 0.0
        %937 = vmatpush1.msra.mxu0 0.0
        %938 = vmatprep.subr.mxu0 0.0
        %939 = vmatpush1.msra.mxu0 0.0
        %940 = vmatprep.subr.mxu0 0.0
        %941 = vmatpush1.msra.mxu0 0.0
        %942 = vmatprep.subr.mxu0 0.0
        %943 = vmatpush1.msra.mxu0 0.0
        %944 = vmatprep.subr.mxu0 0.0
        %945 = vmatpush1.msra.mxu0 0.0
        %946 = vmatprep.subr.mxu0 0.0
        %947 = vmatpush1.msra.mxu0 0.0
        %948 = vmatprep.subr.mxu0 0.0
        %949 = vmatpush1.msra.mxu0 0.0
        %950 = vmatprep.subr.mxu0 0.0
        %951 = vmatpush1.msra.mxu0 0.0
        %952 = vmatprep.subr.mxu0 0.0
        %953 = vmatpush1.msra.mxu0 0.0
        %954 = vmatprep.subr.mxu0 0.0
        %955 = vmatpush1.msra.mxu0 0.0
        %956 = vmatprep.subr.mxu0 0.0
        %957 = vmatpush1.msra.mxu0 0.0
        %958 = vmatprep.subr.mxu0 0.0
        %959 = vmatpush1.msra.mxu0 0.0
        %960 = vmatprep.subr.mxu0 0.0
        %961 = vmatpush1.msra.mxu0 0.0
        %962 = vmatprep.mubr.f32.mxu0 0.0
        %963 = vmatmul.mubr.f32.gmra.mrb[0].mxu0 %v751
        %v964 = vpop.f32.mrb[0].mxu0
        %v965 = vadd.f32 0.0, %v964
        %v966 = vpop.f32.mrb[0].mxu0
        %967 = vdwg.mxu0
        %v968 = vmax.f32 %v895, %v965
        %v971 = vunpack.c.l.s4 1966171168
        %v972 = vunpack.c.0.s8 %v971
        %v973 = vlaneseq
        %v974 = vshrl.u32 %v973, 7
        %v975 = vsub.s32 %v972, %v974
        %v976 = vrot.slane %v968, %v975
        %v977 = vcombine.high %v976, %v976
        %v979 = vunpack.c.l.s4 1966171168
        %v980 = vunpack.c.0.s8 %v979
        %v981 = vlaneseq
        %v982 = vshrl.u32 %v981, 7
        %v983 = vsub.s32 %v980, %v982
        %v984 = vrot.slane %v976, %v983
        %v986 = vunpack.c.l.s4 1966171168
        %v987 = vunpack.c.0.s8 %v986
        %v988 = vlaneseq
        %v989 = vshrl.u32 %v988, 7
        %v990 = vsub.s32 %v987, %v989
        %v991 = vrot.slane %v977, %v990
        %994 = vst.msk [vmem:[%s190 + $0x2] sm:$0x1] %vm461, %v984
        %995 = vst.msk [vmem:[%s190 + $0xa] sm:$0x1] %vm461, %v991
        %v996 = vld [vmem:[%s157 + $0x9] sm:$0x7]
        %v997 = vld [vmem:[%s157 + $0x19] sm:$0x7]
        %v998 = vsel %vm194, %v996, -inf
        %v999 = vrot.slane %v998, 4
        %v1000 = vmax.f32 %v998, %v999
        %v1001 = vrot.slane %v1000, 2
        %v1002 = vmax.f32 %v1000, %v1001
        %v1003 = vrot.slane %v1002, 1
        %v1004 = vmax.f32 %v1002, %v1003
        %v1005 = vsel %vm194, %v997, -inf
        %v1006 = vrot.slane %v1005, 4
        %v1007 = vmax.f32 %v1005, %v1006
        %v1008 = vrot.slane %v1007, 2
        %v1009 = vmax.f32 %v1007, %v1008
        %v1010 = vrot.slane %v1009, 1
        %v1011 = vmax.f32 %v1009, %v1010
        %v1012 = vld [vmem:[%s1] sm:$0xff]
        %v1013 = vld [vmem:[%s1 + $0x8] sm:$0xff]
        %v1016 = vsel %vm213, %v1011, %v1004
        %v1017 = vsel %vm215, %v1016, 0
        %1019 = vmatprep.subr.mxu0 0.0
        %1020 = vmatpush1.msra.mxu0 %v1012
        %1021 = vmatprep.subr.mxu0 0.0
        %1022 = vmatpush1.msra.mxu0 %v1013
        %1023 = vmatprep.subr.mxu0 0.0
        %1024 = vmatpush1.msra.mxu0 0.0
        %1025 = vmatprep.subr.mxu0 0.0
        %1026 = vmatpush1.msra.mxu0 0.0
        %1027 = vmatprep.subr.mxu0 0.0
        %1028 = vmatpush1.msra.mxu0 0.0
        %1029 = vmatprep.subr.mxu0 0.0
        %1030 = vmatpush1.msra.mxu0 0.0
        %1031 = vmatprep.subr.mxu0 0.0
        %1032 = vmatpush1.msra.mxu0 0.0
        %1033 = vmatprep.subr.mxu0 0.0
        %1034 = vmatpush1.msra.mxu0 0.0
        %1035 = vmatprep.subr.mxu0 0.0
        %1036 = vmatpush1.msra.mxu0 0.0
        %1037 = vmatprep.subr.mxu0 0.0
        %1038 = vmatpush1.msra.mxu0 0.0
        %1039 = vmatprep.subr.mxu0 0.0
        %1040 = vmatpush1.msra.mxu0 0.0
        %1041 = vmatprep.subr.mxu0 0.0
        %1042 = vmatpush1.msra.mxu0 0.0
        %1043 = vmatprep.subr.mxu0 0.0
        %1044 = vmatpush1.msra.mxu0 0.0
        %1045 = vmatprep.subr.mxu0 0.0
        %1046 = vmatpush1.msra.mxu0 0.0
        %1047 = vmatprep.subr.mxu0 0.0
        %1048 = vmatpush1.msra.mxu0 0.0
        %1049 = vmatprep.subr.mxu0 0.0
        %1050 = vmatpush1.msra.mxu0 0.0
        %1051 = vmatprep.subr.mxu0 0.0
        %1052 = vmatpush1.msra.mxu0 0.0
        %1053 = vmatprep.subr.mxu0 0.0
        %1054 = vmatpush1.msra.mxu0 0.0
        %1055 = vmatprep.subr.mxu0 0.0
        %1056 = vmatpush1.msra.mxu0 0.0
        %1057 = vmatprep.subr.mxu0 0.0
        %1058 = vmatpush1.msra.mxu0 0.0
        %1059 = vmatprep.subr.mxu0 0.0
        %1060 = vmatpush1.msra.mxu0 0.0
        %1061 = vmatprep.subr.mxu0 0.0
        %1062 = vmatpush1.msra.mxu0 0.0
        %1063 = vmatprep.subr.mxu0 0.0
        %1064 = vmatpush1.msra.mxu0 0.0
        %1065 = vmatprep.subr.mxu0 0.0
        %1066 = vmatpush1.msra.mxu0 0.0
        %1067 = vmatprep.subr.mxu0 0.0
        %1068 = vmatpush1.msra.mxu0 0.0
        %1069 = vmatprep.subr.mxu0 0.0
        %1070 = vmatpush1.msra.mxu0 0.0
        %1071 = vmatprep.subr.mxu0 0.0
        %1072 = vmatpush1.msra.mxu0 0.0
        %1073 = vmatprep.subr.mxu0 0.0
        %1074 = vmatpush1.msra.mxu0 0.0
        %1075 = vmatprep.subr.mxu0 0.0
        %1076 = vmatpush1.msra.mxu0 0.0
        %1077 = vmatprep.subr.mxu0 0.0
        %1078 = vmatpush1.msra.mxu0 0.0
        %1079 = vmatprep.subr.mxu0 0.0
        %1080 = vmatpush1.msra.mxu0 0.0
        %1081 = vmatprep.subr.mxu0 0.0
        %1082 = vmatpush1.msra.mxu0 0.0
        %1083 = vmatprep.mubr.f32.mxu0 0.0
        %1084 = vmatmul.mubr.f32.gmra.mrb[0].mxu0 %v1017
        %v1085 = vpop.f32.mrb[0].mxu0
        %v1086 = vadd.f32 0.0, %v1085
        %v1087 = vpop.f32.mrb[0].mxu0
        %1088 = vdwg.mxu0
        %v1089 = vld [vmem:[%s288] sm:$0xff]
        %v1090 = vld [vmem:[%s288 + $0x8] sm:$0xff]
        %1091 = vmatprep.subr.mxu0 0.0
        %1092 = vmatpush1.msra.mxu0 %v1089
        %1093 = vmatprep.subr.mxu0 0.0
        %1094 = vmatpush1.msra.mxu0 %v1090
        %1095 = vmatprep.subr.mxu0 0.0
        %1096 = vmatpush1.msra.mxu0 0.0
        %1097 = vmatprep.subr.mxu0 0.0
        %1098 = vmatpush1.msra.mxu0 0.0
        %1099 = vmatprep.subr.mxu0 0.0
        %1100 = vmatpush1.msra.mxu0 0.0
        %1101 = vmatprep.subr.mxu0 0.0
        %1102 = vmatpush1.msra.mxu0 0.0
        %1103 = vmatprep.subr.mxu0 0.0
        %1104 = vmatpush1.msra.mxu0 0.0
        %1105 = vmatprep.subr.mxu0 0.0
        %1106 = vmatpush1.msra.mxu0 0.0
        %1107 = vmatprep.subr.mxu0 0.0
        %1108 = vmatpush1.msra.mxu0 0.0
        %1109 = vmatprep.subr.mxu0 0.0
        %1110 = vmatpush1.msra.mxu0 0.0
        %1111 = vmatprep.subr.mxu0 0.0
        %1112 = vmatpush1.msra.mxu0 0.0
        %1113 = vmatprep.subr.mxu0 0.0
        %1114 = vmatpush1.msra.mxu0 0.0
        %1115 = vmatprep.subr.mxu0 0.0
        %1116 = vmatpush1.msra.mxu0 0.0
        %1117 = vmatprep.subr.mxu0 0.0
        %1118 = vmatpush1.msra.mxu0 0.0
        %1119 = vmatprep.subr.mxu0 0.0
        %1120 = vmatpush1.msra.mxu0 0.0
        %1121 = vmatprep.subr.mxu0 0.0
        %1122 = vmatpush1.msra.mxu0 0.0
        %1123 = vmatprep.subr.mxu0 0.0
        %1124 = vmatpush1.msra.mxu0 0.0
        %1125 = vmatprep.subr.mxu0 0.0
        %1126 = vmatpush1.msra.mxu0 0.0
        %1127 = vmatprep.subr.mxu0 0.0
        %1128 = vmatpush1.msra.mxu0 0.0
        %1129 = vmatprep.subr.mxu0 0.0
        %1130 = vmatpush1.msra.mxu0 0.0
        %1131 = vmatprep.subr.mxu0 0.0
        %1132 = vmatpush1.msra.mxu0 0.0
        %1133 = vmatprep.subr.mxu0 0.0
        %1134 = vmatpush1.msra.mxu0 0.0
        %1135 = vmatprep.subr.mxu0 0.0
        %1136 = vmatpush1.msra.mxu0 0.0
        %1137 = vmatprep.subr.mxu0 0.0
        %1138 = vmatpush1.msra.mxu0 0.0
        %1139 = vmatprep.subr.mxu0 0.0
        %1140 = vmatpush1.msra.mxu0 0.0
        %1141 = vmatprep.subr.mxu0 0.0
        %1142 = vmatpush1.msra.mxu0 0.0
        %1143 = vmatprep.subr.mxu0 0.0
        %1144 = vmatpush1.msra.mxu0 0.0
        %1145 = vmatprep.subr.mxu0 0.0
        %1146 = vmatpush1.msra.mxu0 0.0
        %1147 = vmatprep.subr.mxu0 0.0
        %1148 = vmatpush1.msra.mxu0 0.0
        %1149 = vmatprep.subr.mxu0 0.0
        %1150 = vmatpush1.msra.mxu0 0.0
        %1151 = vmatprep.subr.mxu0 0.0
        %1152 = vmatpush1.msra.mxu0 0.0
        %1153 = vmatprep.subr.mxu0 0.0
        %1154 = vmatpush1.msra.mxu0 0.0
        %1155 = vmatprep.mubr.f32.mxu0 0.0
        %1156 = vmatmul.mubr.f32.gmra.mrb[0].mxu0 %v1017
        %v1157 = vpop.f32.mrb[0].mxu0
        %v1158 = vadd.f32 0.0, %v1157
        %v1159 = vpop.f32.mrb[0].mxu0
        %1160 = vdwg.mxu0
        %v1161 = vmax.f32 %v1086, %v1158
        %v1162 = vld [vmem:[%s362] sm:$0xff]
        %v1163 = vld [vmem:[%s362 + $0x8] sm:$0xff]
        %1164 = vmatprep.subr.mxu0 0.0
        %1165 = vmatpush1.msra.mxu0 %v1162
        %1166 = vmatprep.subr.mxu0 0.0
        %1167 = vmatpush1.msra.mxu0 %v1163
        %1168 = vmatprep.subr.mxu0 0.0
        %1169 = vmatpush1.msra.mxu0 0.0
        %1170 = vmatprep.subr.mxu0 0.0
        %1171 = vmatpush1.msra.mxu0 0.0
        %1172 = vmatprep.subr.mxu0 0.0
        %1173 = vmatpush1.msra.mxu0 0.0
        %1174 = vmatprep.subr.mxu0 0.0
        %1175 = vmatpush1.msra.mxu0 0.0
        %1176 = vmatprep.subr.mxu0 0.0
        %1177 = vmatpush1.msra.mxu0 0.0
        %1178 = vmatprep.subr.mxu0 0.0
        %1179 = vmatpush1.msra.mxu0 0.0
        %1180 = vmatprep.subr.mxu0 0.0
        %1181 = vmatpush1.msra.mxu0 0.0
        %1182 = vmatprep.subr.mxu0 0.0
        %1183 = vmatpush1.msra.mxu0 0.0
        %1184 = vmatprep.subr.mxu0 0.0
        %1185 = vmatpush1.msra.mxu0 0.0
        %1186 = vmatprep.subr.mxu0 0.0
        %1187 = vmatpush1.msra.mxu0 0.0
        %1188 = vmatprep.subr.mxu0 0.0
        %1189 = vmatpush1.msra.mxu0 0.0
        %1190 = vmatprep.subr.mxu0 0.0
        %1191 = vmatpush1.msra.mxu0 0.0
        %1192 = vmatprep.subr.mxu0 0.0
        %1193 = vmatpush1.msra.mxu0 0.0
        %1194 = vmatprep.subr.mxu0 0.0
        %1195 = vmatpush1.msra.mxu0 0.0
        %1196 = vmatprep.subr.mxu0 0.0
        %1197 = vmatpush1.msra.mxu0 0.0
        %1198 = vmatprep.subr.mxu0 0.0
        %1199 = vmatpush1.msra.mxu0 0.0
        %1200 = vmatprep.subr.mxu0 0.0
        %1201 = vmatpush1.msra.mxu0 0.0
        %1202 = vmatprep.subr.mxu0 0.0
        %1203 = vmatpush1.msra.mxu0 0.0
        %1204 = vmatprep.subr.mxu0 0.0
        %1205 = vmatpush1.msra.mxu0 0.0
        %1206 = vmatprep.subr.mxu0 0.0
        %1207 = vmatpush1.msra.mxu0 0.0
        %1208 = vmatprep.subr.mxu0 0.0
        %1209 = vmatpush1.msra.mxu0 0.0
        %1210 = vmatprep.subr.mxu0 0.0
        %1211 = vmatpush1.msra.mxu0 0.0
        %1212 = vmatprep.subr.mxu0 0.0
        %1213 = vmatpush1.msra.mxu0 0.0
        %1214 = vmatprep.subr.mxu0 0.0
        %1215 = vmatpush1.msra.mxu0 0.0
        %1216 = vmatprep.subr.mxu0 0.0
        %1217 = vmatpush1.msra.mxu0 0.0
        %1218 = vmatprep.subr.mxu0 0.0
        %1219 = vmatpush1.msra.mxu0 0.0
        %1220 = vmatprep.subr.mxu0 0.0
        %1221 = vmatpush1.msra.mxu0 0.0
        %1222 = vmatprep.subr.mxu0 0.0
        %1223 = vmatpush1.msra.mxu0 0.0
        %1224 = vmatprep.subr.mxu0 0.0
        %1225 = vmatpush1.msra.mxu0 0.0
        %1226 = vmatprep.subr.mxu0 0.0
        %1227 = vmatpush1.msra.mxu0 0.0
        %1228 = vmatprep.mubr.f32.mxu0 0.0
        %1229 = vmatmul.mubr.f32.gmra.mrb[0].mxu0 %v1017
        %v1230 = vpop.f32.mrb[0].mxu0
        %v1231 = vadd.f32 0.0, %v1230
        %v1232 = vpop.f32.mrb[0].mxu0
        %1233 = vdwg.mxu0
        %v1234 = vmax.f32 %v1161, %v1231
        %v1237 = vunpack.c.l.s4 1966171168
        %v1238 = vunpack.c.0.s8 %v1237
        %v1239 = vlaneseq
        %v1240 = vshrl.u32 %v1239, 7
        %v1241 = vsub.s32 %v1238, %v1240
        %v1242 = vrot.slane %v1234, %v1241
        %v1243 = vcombine.high %v1242, %v1242
        %v1245 = vunpack.c.l.s4 1966171168
        %v1246 = vunpack.c.0.s8 %v1245
        %v1247 = vlaneseq
        %v1248 = vshrl.u32 %v1247, 7
        %v1249 = vsub.s32 %v1246, %v1248
        %v1250 = vrot.slane %v1242, %v1249
        %v1252 = vunpack.c.l.s4 1966171168
        %v1253 = vunpack.c.0.s8 %v1252
        %v1254 = vlaneseq
        %v1255 = vshrl.u32 %v1254, 7
        %v1256 = vsub.s32 %v1253, %v1255
        %v1257 = vrot.slane %v1243, %v1256
        %1260 = vst.msk [vmem:[%s190 + $0x3] sm:$0x1] %vm461, %v1250
        %1261 = vst.msk [vmem:[%s190 + $0xb] sm:$0x1] %vm461, %v1257
        %v1262 = vld [vmem:[%s157 + $0xc] sm:$0x7]
        %v1263 = vld [vmem:[%s157 + $0x1c] sm:$0x7]
        %v1264 = vsel %vm194, %v1262, -inf
        %v1265 = vrot.slane %v1264, 4
        %v1266 = vmax.f32 %v1264, %v1265
        %v1267 = vrot.slane %v1266, 2
        %v1268 = vmax.f32 %v1266, %v1267
        %v1269 = vrot.slane %v1268, 1
        %v1270 = vmax.f32 %v1268, %v1269
        %v1271 = vsel %vm194, %v1263, -inf
        %v1272 = vrot.slane %v1271, 4
        %v1273 = vmax.f32 %v1271, %v1272
        %v1274 = vrot.slane %v1273, 2
        %v1275 = vmax.f32 %v1273, %v1274
        %v1276 = vrot.slane %v1275, 1
        %v1277 = vmax.f32 %v1275, %v1276
        %v1278 = vld [vmem:[%s1] sm:$0xff]
        %v1279 = vld [vmem:[%s1 + $0x8] sm:$0xff]
        %v1282 = vsel %vm213, %v1277, %v1270
        %v1283 = vsel %vm215, %v1282, 0
        %1285 = vmatprep.subr.mxu0 0.0
        %1286 = vmatpush1.msra.mxu0 %v1278
        %1287 = vmatprep.subr.mxu0 0.0
        %1288 = vmatpush1.msra.mxu0 %v1279
        %1289 = vmatprep.subr.mxu0 0.0
        %1290 = vmatpush1.msra.mxu0 0.0
        %1291 = vmatprep.subr.mxu0 0.0
        %1292 = vmatpush1.msra.mxu0 0.0
        %1293 = vmatprep.subr.mxu0 0.0
        %1294 = vmatpush1.msra.mxu0 0.0
        %1295 = vmatprep.subr.mxu0 0.0
        %1296 = vmatpush1.msra.mxu0 0.0
        %1297 = vmatprep.subr.mxu0 0.0
        %1298 = vmatpush1.msra.mxu0 0.0
        %1299 = vmatprep.subr.mxu0 0.0
        %1300 = vmatpush1.msra.mxu0 0.0
        %1301 = vmatprep.subr.mxu0 0.0
        %1302 = vmatpush1.msra.mxu0 0.0
        %1303 = vmatprep.subr.mxu0 0.0
        %1304 = vmatpush1.msra.mxu0 0.0
        %1305 = vmatprep.subr.mxu0 0.0
        %1306 = vmatpush1.msra.mxu0 0.0
        %1307 = vmatprep.subr.mxu0 0.0
        %1308 = vmatpush1.msra.mxu0 0.0
        %1309 = vmatprep.subr.mxu0 0.0
        %1310 = vmatpush1.msra.mxu0 0.0
        %1311 = vmatprep.subr.mxu0 0.0
        %1312 = vmatpush1.msra.mxu0 0.0
        %1313 = vmatprep.subr.mxu0 0.0
        %1314 = vmatpush1.msra.mxu0 0.0
        %1315 = vmatprep.subr.mxu0 0.0
        %1316 = vmatpush1.msra.mxu0 0.0
        %1317 = vmatprep.subr.mxu0 0.0
        %1318 = vmatpush1.msra.mxu0 0.0
        %1319 = vmatprep.subr.mxu0 0.0
        %1320 = vmatpush1.msra.mxu0 0.0
        %1321 = vmatprep.subr.mxu0 0.0
        %1322 = vmatpush1.msra.mxu0 0.0
        %1323 = vmatprep.subr.mxu0 0.0
        %1324 = vmatpush1.msra.mxu0 0.0
        %1325 = vmatprep.subr.mxu0 0.0
        %1326 = vmatpush1.msra.mxu0 0.0
        %1327 = vmatprep.subr.mxu0 0.0
        %1328 = vmatpush1.msra.mxu0 0.0
        %1329 = vmatprep.subr.mxu0 0.0
        %1330 = vmatpush1.msra.mxu0 0.0
        %1331 = vmatprep.subr.mxu0 0.0
        %1332 = vmatpush1.msra.mxu0 0.0
        %1333 = vmatprep.subr.mxu0 0.0
        %1334 = vmatpush1.msra.mxu0 0.0
        %1335 = vmatprep.subr.mxu0 0.0
        %1336 = vmatpush1.msra.mxu0 0.0
        %1337 = vmatprep.subr.mxu0 0.0
        %1338 = vmatpush1.msra.mxu0 0.0
        %1339 = vmatprep.subr.mxu0 0.0
        %1340 = vmatpush1.msra.mxu0 0.0
        %1341 = vmatprep.subr.mxu0 0.0
        %1342 = vmatpush1.msra.mxu0 0.0
        %1343 = vmatprep.subr.mxu0 0.0
        %1344 = vmatpush1.msra.mxu0 0.0
        %1345 = vmatprep.subr.mxu0 0.0
        %1346 = vmatpush1.msra.mxu0 0.0
        %1347 = vmatprep.subr.mxu0 0.0
        %1348 = vmatpush1.msra.mxu0 0.0
        %1349 = vmatprep.mubr.f32.mxu0 0.0
        %1350 = vmatmul.mubr.f32.gmra.mrb[0].mxu0 %v1283
        %v1351 = vpop.f32.mrb[0].mxu0
        %v1352 = vadd.f32 0.0, %v1351
        %v1353 = vpop.f32.mrb[0].mxu0
        %1354 = vdwg.mxu0
        %v1355 = vld [vmem:[%s288] sm:$0xff]
        %v1356 = vld [vmem:[%s288 + $0x8] sm:$0xff]
        %1357 = vmatprep.subr.mxu0 0.0
        %1358 = vmatpush1.msra.mxu0 %v1355
        %1359 = vmatprep.subr.mxu0 0.0
        %1360 = vmatpush1.msra.mxu0 %v1356
        %1361 = vmatprep.subr.mxu0 0.0
        %1362 = vmatpush1.msra.mxu0 0.0
        %1363 = vmatprep.subr.mxu0 0.0
        %1364 = vmatpush1.msra.mxu0 0.0
        %1365 = vmatprep.subr.mxu0 0.0
        %1366 = vmatpush1.msra.mxu0 0.0
        %1367 = vmatprep.subr.mxu0 0.0
        %1368 = vmatpush1.msra.mxu0 0.0
        %1369 = vmatprep.subr.mxu0 0.0
        %1370 = vmatpush1.msra.mxu0 0.0
        %1371 = vmatprep.subr.mxu0 0.0
        %1372 = vmatpush1.msra.mxu0 0.0
        %1373 = vmatprep.subr.mxu0 0.0
        %1374 = vmatpush1.msra.mxu0 0.0
        %1375 = vmatprep.subr.mxu0 0.0
        %1376 = vmatpush1.msra.mxu0 0.0
        %1377 = vmatprep.subr.mxu0 0.0
        %1378 = vmatpush1.msra.mxu0 0.0
        %1379 = vmatprep.subr.mxu0 0.0
        %1380 = vmatpush1.msra.mxu0 0.0
        %1381 = vmatprep.subr.mxu0 0.0
        %1382 = vmatpush1.msra.mxu0 0.0
        %1383 = vmatprep.subr.mxu0 0.0
        %1384 = vmatpush1.msra.mxu0 0.0
        %1385 = vmatprep.subr.mxu0 0.0
        %1386 = vmatpush1.msra.mxu0 0.0
        %1387 = vmatprep.subr.mxu0 0.0
        %1388 = vmatpush1.msra.mxu0 0.0
        %1389 = vmatprep.subr.mxu0 0.0
        %1390 = vmatpush1.msra.mxu0 0.0
        %1391 = vmatprep.subr.mxu0 0.0
        %1392 = vmatpush1.msra.mxu0 0.0
        %1393 = vmatprep.subr.mxu0 0.0
        %1394 = vmatpush1.msra.mxu0 0.0
        %1395 = vmatprep.subr.mxu0 0.0
        %1396 = vmatpush1.msra.mxu0 0.0
        %1397 = vmatprep.subr.mxu0 0.0
        %1398 = vmatpush1.msra.mxu0 0.0
        %1399 = vmatprep.subr.mxu0 0.0
        %1400 = vmatpush1.msra.mxu0 0.0
        %1401 = vmatprep.subr.mxu0 0.0
        %1402 = vmatpush1.msra.mxu0 0.0
        %1403 = vmatprep.subr.mxu0 0.0
        %1404 = vmatpush1.msra.mxu0 0.0
        %1405 = vmatprep.subr.mxu0 0.0
        %1406 = vmatpush1.msra.mxu0 0.0
        %1407 = vmatprep.subr.mxu0 0.0
        %1408 = vmatpush1.msra.mxu0 0.0
        %1409 = vmatprep.subr.mxu0 0.0
        %1410 = vmatpush1.msra.mxu0 0.0
        %1411 = vmatprep.subr.mxu0 0.0
        %1412 = vmatpush1.msra.mxu0 0.0
        %1413 = vmatprep.subr.mxu0 0.0
        %1414 = vmatpush1.msra.mxu0 0.0
        %1415 = vmatprep.subr.mxu0 0.0
        %1416 = vmatpush1.msra.mxu0 0.0
        %1417 = vmatprep.subr.mxu0 0.0
        %1418 = vmatpush1.msra.mxu0 0.0
        %1419 = vmatprep.subr.mxu0 0.0
        %1420 = vmatpush1.msra.mxu0 0.0
        %1421 = vmatprep.mubr.f32.mxu0 0.0
        %1422 = vmatmul.mubr.f32.gmra.mrb[0].mxu0 %v1283
        %v1423 = vpop.f32.mrb[0].mxu0
        %v1424 = vadd.f32 0.0, %v1423
        %v1425 = vpop.f32.mrb[0].mxu0
        %1426 = vdwg.mxu0
        %v1427 = vmax.f32 %v1352, %v1424
        %v1428 = vld [vmem:[%s362] sm:$0xff]
        %v1429 = vld [vmem:[%s362 + $0x8] sm:$0xff]
        %1430 = vmatprep.subr.mxu0 0.0
        %1431 = vmatpush1.msra.mxu0 %v1428
        %1432 = vmatprep.subr.mxu0 0.0
        %1433 = vmatpush1.msra.mxu0 %v1429
        %1434 = vmatprep.subr.mxu0 0.0
        %1435 = vmatpush1.msra.mxu0 0.0
        %1436 = vmatprep.subr.mxu0 0.0
        %1437 = vmatpush1.msra.mxu0 0.0
        %1438 = vmatprep.subr.mxu0 0.0
        %1439 = vmatpush1.msra.mxu0 0.0
        %1440 = vmatprep.subr.mxu0 0.0
        %1441 = vmatpush1.msra.mxu0 0.0
        %1442 = vmatprep.subr.mxu0 0.0
        %1443 = vmatpush1.msra.mxu0 0.0
        %1444 = vmatprep.subr.mxu0 0.0
        %1445 = vmatpush1.msra.mxu0 0.0
        %1446 = vmatprep.subr.mxu0 0.0
        %1447 = vmatpush1.msra.mxu0 0.0
        %1448 = vmatprep.subr.mxu0 0.0
        %1449 = vmatpush1.msra.mxu0 0.0
        %1450 = vmatprep.subr.mxu0 0.0
        %1451 = vmatpush1.msra.mxu0 0.0
        %1452 = vmatprep.subr.mxu0 0.0
        %1453 = vmatpush1.msra.mxu0 0.0
        %1454 = vmatprep.subr.mxu0 0.0
        %1455 = vmatpush1.msra.mxu0 0.0
        %1456 = vmatprep.subr.mxu0 0.0
        %1457 = vmatpush1.msra.mxu0 0.0
        %1458 = vmatprep.subr.mxu0 0.0
        %1459 = vmatpush1.msra.mxu0 0.0
        %1460 = vmatprep.subr.mxu0 0.0
        %1461 = vmatpush1.msra.mxu0 0.0
        %1462 = vmatprep.subr.mxu0 0.0
        %1463 = vmatpush1.msra.mxu0 0.0
        %1464 = vmatprep.subr.mxu0 0.0
        %1465 = vmatpush1.msra.mxu0 0.0
        %1466 = vmatprep.subr.mxu0 0.0
        %1467 = vmatpush1.msra.mxu0 0.0
        %1468 = vmatprep.subr.mxu0 0.0
        %1469 = vmatpush1.msra.mxu0 0.0
        %1470 = vmatprep.subr.mxu0 0.0
        %1471 = vmatpush1.msra.mxu0 0.0
        %1472 = vmatprep.subr.mxu0 0.0
        %1473 = vmatpush1.msra.mxu0 0.0
        %1474 = vmatprep.subr.mxu0 0.0
        %1475 = vmatpush1.msra.mxu0 0.0
        %1476 = vmatprep.subr.mxu0 0.0
        %1477 = vmatpush1.msra.mxu0 0.0
        %1478 = vmatprep.subr.mxu0 0.0
        %1479 = vmatpush1.msra.mxu0 0.0
        %1480 = vmatprep.subr.mxu0 0.0
        %1481 = vmatpush1.msra.mxu0 0.0
        %1482 = vmatprep.subr.mxu0 0.0
        %1483 = vmatpush1.msra.mxu0 0.0
        %1484 = vmatprep.subr.mxu0 0.0
        %1485 = vmatpush1.msra.mxu0 0.0
        %1486 = vmatprep.subr.mxu0 0.0
        %1487 = vmatpush1.msra.mxu0 0.0
        %1488 = vmatprep.subr.mxu0 0.0
        %1489 = vmatpush1.msra.mxu0 0.0
        %1490 = vmatprep.subr.mxu0 0.0
        %1491 = vmatpush1.msra.mxu0 0.0
        %1492 = vmatprep.subr.mxu0 0.0
        %1493 = vmatpush1.msra.mxu0 0.0
        %1494 = vmatprep.mubr.f32.mxu0 0.0
        %1495 = vmatmul.mubr.f32.gmra.mrb[0].mxu0 %v1283
        %v1496 = vpop.f32.mrb[0].mxu0
        %v1497 = vadd.f32 0.0, %v1496
        %v1498 = vpop.f32.mrb[0].mxu0
        %1499 = vdwg.mxu0
        %v1500 = vmax.f32 %v1427, %v1497
        %v1503 = vunpack.c.l.s4 1966171168
        %v1504 = vunpack.c.0.s8 %v1503
        %v1505 = vlaneseq
        %v1506 = vshrl.u32 %v1505, 7
        %v1507 = vsub.s32 %v1504, %v1506
        %v1508 = vrot.slane %v1500, %v1507
        %v1509 = vcombine.high %v1508, %v1508
        %v1511 = vunpack.c.l.s4 1966171168
        %v1512 = vunpack.c.0.s8 %v1511
        %v1513 = vlaneseq
        %v1514 = vshrl.u32 %v1513, 7
        %v1515 = vsub.s32 %v1512, %v1514
        %v1516 = vrot.slane %v1508, %v1515
        %v1518 = vunpack.c.l.s4 1966171168
        %v1519 = vunpack.c.0.s8 %v1518
        %v1520 = vlaneseq
        %v1521 = vshrl.u32 %v1520, 7
        %v1522 = vsub.s32 %v1519, %v1521
        %v1523 = vrot.slane %v1509, %v1522
        %1526 = vst.msk [vmem:[%s190 + $0x4] sm:$0x1] %vm461, %v1516
        %1527 = vst.msk [vmem:[%s190 + $0xc] sm:$0x1] %vm461, %v1523
        %v1528 = vld [vmem:[%s157 + $0xf] sm:$0x1]
        %v1529 = vld [vmem:[%s157 + $0x1f] sm:$0x1]
        %v1530 = vld [vmem:[%s1] sm:$0xff]
        %v1531 = vld [vmem:[%s1 + $0x8] sm:$0xff]
        %v1534 = vrot.slane %v1529, 7
        %v1535 = vsel %vm213, %v1534, %v1528
        %v1536 = vsel %vm215, %v1535, 0
        %1538 = vmatprep.subr.mxu0 0.0
        %1539 = vmatpush1.msra.mxu0 %v1530
        %1540 = vmatprep.subr.mxu0 0.0
        %1541 = vmatpush1.msra.mxu0 %v1531
        %1542 = vmatprep.subr.mxu0 0.0
        %1543 = vmatpush1.msra.mxu0 0.0
        %1544 = vmatprep.subr.mxu0 0.0
        %1545 = vmatpush1.msra.mxu0 0.0
        %1546 = vmatprep.subr.mxu0 0.0
        %1547 = vmatpush1.msra.mxu0 0.0
        %1548 = vmatprep.subr.mxu0 0.0
        %1549 = vmatpush1.msra.mxu0 0.0
        %1550 = vmatprep.subr.mxu0 0.0
        %1551 = vmatpush1.msra.mxu0 0.0
        %1552 = vmatprep.subr.mxu0 0.0
        %1553 = vmatpush1.msra.mxu0 0.0
        %1554 = vmatprep.subr.mxu0 0.0
        %1555 = vmatpush1.msra.mxu0 0.0
        %1556 = vmatprep.subr.mxu0 0.0
        %1557 = vmatpush1.msra.mxu0 0.0
        %1558 = vmatprep.subr.mxu0 0.0
        %1559 = vmatpush1.msra.mxu0 0.0
        %1560 = vmatprep.subr.mxu0 0.0
        %1561 = vmatpush1.msra.mxu0 0.0
        %1562 = vmatprep.subr.mxu0 0.0
        %1563 = vmatpush1.msra.mxu0 0.0
        %1564 = vmatprep.subr.mxu0 0.0
        %1565 = vmatpush1.msra.mxu0 0.0
        %1566 = vmatprep.subr.mxu0 0.0
        %1567 = vmatpush1.msra.mxu0 0.0
        %1568 = vmatprep.subr.mxu0 0.0
        %1569 = vmatpush1.msra.mxu0 0.0
        %1570 = vmatprep.subr.mxu0 0.0
        %1571 = vmatpush1.msra.mxu0 0.0
        %1572 = vmatprep.subr.mxu0 0.0
        %1573 = vmatpush1.msra.mxu0 0.0
        %1574 = vmatprep.subr.mxu0 0.0
        %1575 = vmatpush1.msra.mxu0 0.0
        %1576 = vmatprep.subr.mxu0 0.0
        %1577 = vmatpush1.msra.mxu0 0.0
        %1578 = vmatprep.subr.mxu0 0.0
        %1579 = vmatpush1.msra.mxu0 0.0
        %1580 = vmatprep.subr.mxu0 0.0
        %1581 = vmatpush1.msra.mxu0 0.0
        %1582 = vmatprep.subr.mxu0 0.0
        %1583 = vmatpush1.msra.mxu0 0.0
        %1584 = vmatprep.subr.mxu0 0.0
        %1585 = vmatpush1.msra.mxu0 0.0
        %1586 = vmatprep.subr.mxu0 0.0
        %1587 = vmatpush1.msra.mxu0 0.0
        %1588 = vmatprep.subr.mxu0 0.0
        %1589 = vmatpush1.msra.mxu0 0.0
        %1590 = vmatprep.subr.mxu0 0.0
        %1591 = vmatpush1.msra.mxu0 0.0
        %1592 = vmatprep.subr.mxu0 0.0
        %1593 = vmatpush1.msra.mxu0 0.0
        %1594 = vmatprep.subr.mxu0 0.0
        %1595 = vmatpush1.msra.mxu0 0.0
        %1596 = vmatprep.subr.mxu0 0.0
        %1597 = vmatpush1.msra.mxu0 0.0
        %1598 = vmatprep.subr.mxu0 0.0
        %1599 = vmatpush1.msra.mxu0 0.0
        %1600 = vmatprep.subr.mxu0 0.0
        %1601 = vmatpush1.msra.mxu0 0.0
        %1602 = vmatprep.mubr.f32.mxu0 0.0
        %1603 = vmatmul.mubr.f32.gmra.mrb[0].mxu0 %v1536
        %v1604 = vpop.f32.mrb[0].mxu0
        %v1605 = vadd.f32 0.0, %v1604
        %v1606 = vpop.f32.mrb[0].mxu0
        %1607 = vdwg.mxu0
        %v1608 = vld [vmem:[%s288] sm:$0xff]
        %v1609 = vld [vmem:[%s288 + $0x8] sm:$0xff]
        %1610 = vmatprep.subr.mxu0 0.0
        %1611 = vmatpush1.msra.mxu0 %v1608
        %1612 = vmatprep.subr.mxu0 0.0
        %1613 = vmatpush1.msra.mxu0 %v1609
        %1614 = vmatprep.subr.mxu0 0.0
        %1615 = vmatpush1.msra.mxu0 0.0
        %1616 = vmatprep.subr.mxu0 0.0
        %1617 = vmatpush1.msra.mxu0 0.0
        %1618 = vmatprep.subr.mxu0 0.0
        %1619 = vmatpush1.msra.mxu0 0.0
        %1620 = vmatprep.subr.mxu0 0.0
        %1621 = vmatpush1.msra.mxu0 0.0
        %1622 = vmatprep.subr.mxu0 0.0
        %1623 = vmatpush1.msra.mxu0 0.0
        %1624 = vmatprep.subr.mxu0 0.0
        %1625 = vmatpush1.msra.mxu0 0.0
        %1626 = vmatprep.subr.mxu0 0.0
        %1627 = vmatpush1.msra.mxu0 0.0
        %1628 = vmatprep.subr.mxu0 0.0
        %1629 = vmatpush1.msra.mxu0 0.0
        %1630 = vmatprep.subr.mxu0 0.0
        %1631 = vmatpush1.msra.mxu0 0.0
        %1632 = vmatprep.subr.mxu0 0.0
        %1633 = vmatpush1.msra.mxu0 0.0
        %1634 = vmatprep.subr.mxu0 0.0
        %1635 = vmatpush1.msra.mxu0 0.0
        %1636 = vmatprep.subr.mxu0 0.0
        %1637 = vmatpush1.msra.mxu0 0.0
        %1638 = vmatprep.subr.mxu0 0.0
        %1639 = vmatpush1.msra.mxu0 0.0
        %1640 = vmatprep.subr.mxu0 0.0
        %1641 = vmatpush1.msra.mxu0 0.0
        %1642 = vmatprep.subr.mxu0 0.0
        %1643 = vmatpush1.msra.mxu0 0.0
        %1644 = vmatprep.subr.mxu0 0.0
        %1645 = vmatpush1.msra.mxu0 0.0
        %1646 = vmatprep.subr.mxu0 0.0
        %1647 = vmatpush1.msra.mxu0 0.0
        %1648 = vmatprep.subr.mxu0 0.0
        %1649 = vmatpush1.msra.mxu0 0.0
        %1650 = vmatprep.subr.mxu0 0.0
        %1651 = vmatpush1.msra.mxu0 0.0
        %1652 = vmatprep.subr.mxu0 0.0
        %1653 = vmatpush1.msra.mxu0 0.0
        %1654 = vmatprep.subr.mxu0 0.0
        %1655 = vmatpush1.msra.mxu0 0.0
        %1656 = vmatprep.subr.mxu0 0.0
        %1657 = vmatpush1.msra.mxu0 0.0
        %1658 = vmatprep.subr.mxu0 0.0
        %1659 = vmatpush1.msra.mxu0 0.0
        %1660 = vmatprep.subr.mxu0 0.0
        %1661 = vmatpush1.msra.mxu0 0.0
        %1662 = vmatprep.subr.mxu0 0.0
        %1663 = vmatpush1.msra.mxu0 0.0
        %1664 = vmatprep.subr.mxu0 0.0
        %1665 = vmatpush1.msra.mxu0 0.0
        %1666 = vmatprep.subr.mxu0 0.0
        %1667 = vmatpush1.msra.mxu0 0.0
        %1668 = vmatprep.subr.mxu0 0.0
        %1669 = vmatpush1.msra.mxu0 0.0
        %1670 = vmatprep.subr.mxu0 0.0
        %1671 = vmatpush1.msra.mxu0 0.0
        %1672 = vmatprep.subr.mxu0 0.0
        %1673 = vmatpush1.msra.mxu0 0.0
        %1674 = vmatprep.mubr.f32.mxu0 0.0
        %1675 = vmatmul.mubr.f32.gmra.mrb[0].mxu0 %v1536
        %v1676 = vpop.f32.mrb[0].mxu0
        %v1677 = vadd.f32 0.0, %v1676
        %v1678 = vpop.f32.mrb[0].mxu0
        %1679 = vdwg.mxu0
        %v1680 = vmax.f32 %v1605, %v1677
        %v1681 = vld [vmem:[%s362] sm:$0xff]
        %v1682 = vld [vmem:[%s362 + $0x8] sm:$0xff]
        %1683 = vmatprep.subr.mxu0 0.0
        %1684 = vmatpush1.msra.mxu0 %v1681
        %1685 = vmatprep.subr.mxu0 0.0
        %1686 = vmatpush1.msra.mxu0 %v1682
        %1687 = vmatprep.subr.mxu0 0.0
        %1688 = vmatpush1.msra.mxu0 0.0
        %1689 = vmatprep.subr.mxu0 0.0
        %1690 = vmatpush1.msra.mxu0 0.0
        %1691 = vmatprep.subr.mxu0 0.0
        %1692 = vmatpush1.msra.mxu0 0.0
        %1693 = vmatprep.subr.mxu0 0.0
        %1694 = vmatpush1.msra.mxu0 0.0
        %1695 = vmatprep.subr.mxu0 0.0
        %1696 = vmatpush1.msra.mxu0 0.0
        %1697 = vmatprep.subr.mxu0 0.0
        %1698 = vmatpush1.msra.mxu0 0.0
        %1699 = vmatprep.subr.mxu0 0.0
        %1700 = vmatpush1.msra.mxu0 0.0
        %1701 = vmatprep.subr.mxu0 0.0
        %1702 = vmatpush1.msra.mxu0 0.0
        %1703 = vmatprep.subr.mxu0 0.0
        %1704 = vmatpush1.msra.mxu0 0.0
        %1705 = vmatprep.subr.mxu0 0.0
        %1706 = vmatpush1.msra.mxu0 0.0
        %1707 = vmatprep.subr.mxu0 0.0
        %1708 = vmatpush1.msra.mxu0 0.0
        %1709 = vmatprep.subr.mxu0 0.0
        %1710 = vmatpush1.msra.mxu0 0.0
        %1711 = vmatprep.subr.mxu0 0.0
        %1712 = vmatpush1.msra.mxu0 0.0
        %1713 = vmatprep.subr.mxu0 0.0
        %1714 = vmatpush1.msra.mxu0 0.0
        %1715 = vmatprep.subr.mxu0 0.0
        %1716 = vmatpush1.msra.mxu0 0.0
        %1717 = vmatprep.subr.mxu0 0.0
        %1718 = vmatpush1.msra.mxu0 0.0
        %1719 = vmatprep.subr.mxu0 0.0
        %1720 = vmatpush1.msra.mxu0 0.0
        %1721 = vmatprep.subr.mxu0 0.0
        %1722 = vmatpush1.msra.mxu0 0.0
        %1723 = vmatprep.subr.mxu0 0.0
        %1724 = vmatpush1.msra.mxu0 0.0
        %1725 = vmatprep.subr.mxu0 0.0
        %1726 = vmatpush1.msra.mxu0 0.0
        %1727 = vmatprep.subr.mxu0 0.0
        %1728 = vmatpush1.msra.mxu0 0.0
        %1729 = vmatprep.subr.mxu0 0.0
        %1730 = vmatpush1.msra.mxu0 0.0
        %1731 = vmatprep.subr.mxu0 0.0
        %1732 = vmatpush1.msra.mxu0 0.0
        %1733 = vmatprep.subr.mxu0 0.0
        %1734 = vmatpush1.msra.mxu0 0.0
        %1735 = vmatprep.subr.mxu0 0.0
        %1736 = vmatpush1.msra.mxu0 0.0
        %1737 = vmatprep.subr.mxu0 0.0
        %1738 = vmatpush1.msra.mxu0 0.0
        %1739 = vmatprep.subr.mxu0 0.0
        %1740 = vmatpush1.msra.mxu0 0.0
        %1741 = vmatprep.subr.mxu0 0.0
        %1742 = vmatpush1.msra.mxu0 0.0
        %1743 = vmatprep.subr.mxu0 0.0
        %1744 = vmatpush1.msra.mxu0 0.0
        %1745 = vmatprep.subr.mxu0 0.0
        %1746 = vmatpush1.msra.mxu0 0.0
        %1747 = vmatprep.mubr.f32.mxu0 0.0
        %1748 = vmatmul.mubr.f32.gmra.mrb[0].mxu0 %v1536
        %v1749 = vpop.f32.mrb[0].mxu0
        %v1750 = vadd.f32 0.0, %v1749
        %v1751 = vpop.f32.mrb[0].mxu0
        %1752 = vdwg.mxu0
        %v1753 = vmax.f32 %v1680, %v1750
        %v1756 = vunpack.c.l.s4 1966171168
        %v1757 = vunpack.c.0.s8 %v1756
        %v1758 = vlaneseq
        %v1759 = vshrl.u32 %v1758, 7
        %v1760 = vsub.s32 %v1757, %v1759
        %v1761 = vrot.slane %v1753, %v1760
        %v1762 = vcombine.high %v1761, %v1761
        %v1764 = vunpack.c.l.s4 1966171168
        %v1765 = vunpack.c.0.s8 %v1764
        %v1766 = vlaneseq
        %v1767 = vshrl.u32 %v1766, 7
        %v1768 = vsub.s32 %v1765, %v1767
        %v1769 = vrot.slane %v1761, %v1768
        %v1771 = vunpack.c.l.s4 1966171168
        %v1772 = vunpack.c.0.s8 %v1771
        %v1773 = vlaneseq
        %v1774 = vshrl.u32 %v1773, 7
        %v1775 = vsub.s32 %v1772, %v1774
        %v1776 = vrot.slane %v1762, %v1775
        %1779 = vst.msk [vmem:[%s190 + $0x5] sm:$0x1] %vm461, %v1769
        %1780 = vst.msk [vmem:[%s190 + $0xd] sm:$0x1] %vm461, %v1776
        %s1781 = smul.u32 2, %s20
        %p1782 = scmp.lt.s32.totalorder %s1781, 7
        %s1783 = scalar_select %p1782, %s1781, 7
        %p1784 = scmp.lt.s32.totalorder %s21, 0
        %s1785 = scalar_select %p1784, %s21, 0
        %s1786 = sadd.s32 %s1785, %s1783
        %s1787 = smul.addr %s1786, 8
        %s1788 = scalar_lea.vmem %s2, %s1787
        // Predicated region
        $region33: #{tpu_custom_call.1} parent=27 // pred_check
          %p1789 = pneg %p97
        $region34: #{tpu_custom_call.1} parent=27 // pred_check_branch
          %1791 = sbr.rel (%p1789) target = $region36
        $region35: #{tpu_custom_call.1} parent=27 // pred_region
          %s1792 = smul.u32 2, %s20
        $region36: #{tpu_custom_call.1} parent=27 // pred_fallthru
          _
      $region28: #{tpu_custom_call.1} parent=5 // pred_fallthru
        _
      %p1793 = scmp.le.s32.totalorder 2, %s11
      // Predicated region
      $region37: #{tpu_custom_call.1} parent=5 // pred_check
        %p1794 = pneg %p1793
      $region38: #{tpu_custom_call.1} parent=5 // pred_check_branch
        %1796 = sbr.rel (%p1794) target = $region40
      $region39: #{tpu_custom_call.1} parent=5 // pred_region
        %s1797 = ssub.s32 %s11, 2
        // Predicated region
        $region41: #{tpu_custom_call.1} parent=39 // pred_check
          %p1798 = pneg %p103
        $region42: #{tpu_custom_call.1} parent=39 // pred_check_branch
          %1800 = sbr.rel (%p1798) target = $region44
        $region43: #{tpu_custom_call.1} parent=39 // pred_region
          %s1801 = smul.u32 2, %s22
          %p1802 = scmp.lt.s32.totalorder %s1801, 7
          %s1803 = scalar_select %p1802, %s1801, 7
          %p1804 = scmp.lt.s32.totalorder %s23, 0
          %s1805 = scalar_select %p1804, %s23, 0
          %s1806 = sadd.s32 %s1805, %s1803
          %s1807 = smul.addr %s1806, 8
          %s1808 = scalar_lea.vmem %s2, %s1807
        $region44: #{tpu_custom_call.1} parent=39 // pred_fallthru
          _
      $region40: #{tpu_custom_call.1} parent=5 // pred_fallthru
        _
    $region6: #{tpu_custom_call.1} parent=1 // loop_footer
      %s15 = sadd.s32 1, %s11
    $region7: #{tpu_custom_call.1} parent=1 // loop_footer_branch
      %10 = sbr.rel target = $region3
    $region8: #{tpu_custom_call.1} parent=1 // loop_exit
      _
    %1809 = vsyncpa [#allocation3], 1
    %s1810 = scalar_lea.sflag [#allocation3], 1
    %1811 = vsyncpa %s1810, 1

</llo_original>
